<compile_context>
chip_gen: v7x
topology: tpu7x:2x2x1
jax: 0.10.0
libtpu: 0.0.40
codegen_flags: <defaults>
</compile_context>

<pallas_src>
import functools
import math

import jax
import jax.numpy as jnp
from jax import lax
from jax.experimental import pallas as pl
from jax.experimental.pallas import tpu as pltpu

NUM_HEADS = 4
LN_EPS = 1e-5


def _layernorm(x, gamma, beta):
    mu = jnp.mean(x, axis=-1, keepdims=True)
    xc = x - mu
    var = jnp.mean(xc * xc, axis=-1, keepdims=True)
    inv = lax.rsqrt(var + LN_EPS)
    return xc * inv * gamma + beta


def _gelu_exact(x):
    # PyTorch nn.GELU default is the exact (erf) formulation.
    return 0.5 * x * (1.0 + lax.erf(x * (1.0 / math.sqrt(2.0))))


def block_kernel(x_ref, wqkv_ref, wproj_ref, bproj_ref,
                 ln1g_ref, ln1b_ref, ln2g_ref, ln2b_ref,
                 wfc1_ref, bfc1_ref, wfc2_ref, bfc2_ref,
                 out_ref, *rest, num_heads, save_attn):
    if save_attn:
        attn_ref, qkv_scr, ctx_scr = rest
    else:
        attn_ref = None
        qkv_scr, ctx_scr = rest

    G, N, C = x_ref.shape
    H = num_heads
    hd = C // H
    T = G * N
    mm_dtype = wqkv_ref.dtype                    # matmul operand dtype (bf16)

    x2 = x_ref[...].reshape(T, C).astype(jnp.float32)   # residual stream, f32

    # ---------------- Attention branch: t = proj(softmax(qk^T) v), x += t ----
    xn = _layernorm(x2, ln1g_ref[0], ln1b_ref[0])        # f32 statistics
    # One wide QKV matmul (full MXU output width & contraction depth); the
    # attention scale is already folded into the q columns of wqkv on the host.
    qkv = jnp.dot(xn.astype(mm_dtype), wqkv_ref[...],
                  preferred_element_type=jnp.float32)     # (T, 3C), f32 accum
    qkv_scr[...] = qkv.astype(mm_dtype)                   # park in VMEM scratch

    for h in range(H):                                    # static loop, small H
        # Per-head q/k/v: static lane-block loads from the scratch
        # (PyTorch column order: [3, H, hd]).
        q = qkv_scr[:, 0 * C + h * hd: 0 * C + (h + 1) * hd].reshape(G, N, hd)
        k = qkv_scr[:, 1 * C + h * hd: 1 * C + (h + 1) * hd].reshape(G, N, hd)
        v = qkv_scr[:, 2 * C + h * hd: 2 * C + (h + 1) * hd].reshape(G, N, hd)

        logits = jnp.einsum('gnd,gmd->gnm', q, k,
                            preferred_element_type=jnp.float32)   # (G, N, N)
        logits = logits - jnp.max(logits, axis=-1, keepdims=True)
        e = jnp.exp(logits)
        denom = jnp.sum(e, axis=-1, keepdims=True)
        # Exact reciprocal: saved probabilities sum to 1 (PyTorch parity).
        attn = e * pl.reciprocal(denom)                           # (G, N, N) f32
        if save_attn:
            attn_ref[:, h, :, :] = attn.astype(attn_ref.dtype)

        ctx = jnp.einsum('gnm,gmd->gnd', attn.astype(mm_dtype), v,
                         preferred_element_type=jnp.float32)      # (G, N, hd)
        # Stage this head's context in its lane block of the (T, C) scratch so
        # the output projection can be a single full-K matmul.
        ctx_scr[:, h * hd:(h + 1) * hd] = ctx.reshape(T, hd).astype(mm_dtype)

    t = jnp.dot(ctx_scr[...], wproj_ref[...],
                preferred_element_type=jnp.float32) + bproj_ref[0]   # (T, C)

    # LayerScale / DropPath / dropout are identity at the given defaults.
    x2 = x2 + t

    # ---------------- MLP branch: x = x + Mlp(LN2(x)) -------------------------
    xn2 = _layernorm(x2, ln2g_ref[0], ln2b_ref[0])
    h1 = jnp.dot(xn2.astype(mm_dtype), wfc1_ref[...],
                 preferred_element_type=jnp.float32) + bfc1_ref[0]
    h1 = _gelu_exact(h1)                                   # f32
    m = jnp.dot(h1.astype(mm_dtype), wfc2_ref[...],
                preferred_element_type=jnp.float32) + bfc2_ref[0]
    x2 = x2 + m

    out_ref[...] = x2.reshape(G, N, C).astype(out_ref.dtype)


def init_params(key, dim, mlp_ratio=4.0, dtype=jnp.float32):
    hidden = int(dim * mlp_ratio)
    ks = jax.random.split(key, 4)
    s = 0.02
    return {
        "wqkv":  jax.random.normal(ks[0], (dim, 3 * dim), dtype) * s,  # qkv_bias=False
        "wproj": jax.random.normal(ks[1], (dim, dim), dtype) * s,
        "bproj": jnp.zeros((1, dim), dtype),
        "ln1g":  jnp.ones((1, dim), dtype),
        "ln1b":  jnp.zeros((1, dim), dtype),
        "ln2g":  jnp.ones((1, dim), dtype),
        "ln2b":  jnp.zeros((1, dim), dtype),
        "wfc1":  jax.random.normal(ks[2], (dim, hidden), dtype) * s,
        "bfc1":  jnp.zeros((1, hidden), dtype),
        "wfc2":  jax.random.normal(ks[3], (hidden, dim), dtype) * s,
        "bfc2":  jnp.zeros((1, dim), dtype),
    }


def prepare_block_params(p, *, num_heads=NUM_HEADS, compute_dtype=jnp.bfloat16):
    """One-time host-side prep: fold the attention scale into the q columns and
    cast the matmul weights to the compute dtype (bf16).  Biases / LN params
    stay f32 because all elementwise math in the kernel runs in f32."""
    C = p["ln1g"].shape[-1]
    hd = C // num_heads
    scale = hd ** (-0.5)
    wqkv = p["wqkv"].astype(jnp.float32)
    wqkv = jnp.concatenate([wqkv[:, :C] * scale, wqkv[:, C:]], axis=1)
    f32 = jnp.float32
    return {
        "wqkv":  wqkv.astype(compute_dtype),
        "wproj": p["wproj"].astype(compute_dtype),
        "bproj": p["bproj"].astype(f32),
        "ln1g":  p["ln1g"].astype(f32), "ln1b": p["ln1b"].astype(f32),
        "ln2g":  p["ln2g"].astype(f32), "ln2b": p["ln2b"].astype(f32),
        "wfc1":  p["wfc1"].astype(compute_dtype),
        "bfc1":  p["bfc1"].astype(f32),
        "wfc2":  p["wfc2"].astype(compute_dtype),
        "bfc2":  p["bfc2"].astype(f32),
    }


def _pick_group_size(B, N, target_rows, min_steps):
    """Largest divisor G of B with G*N <= target_rows and >= min_steps grid steps."""
    if B <= 1:
        return max(B, 1)
    g_cap = max(1, target_rows // max(N, 1))
    g_cap = min(g_cap, max(1, B // max(1, min_steps)), B)
    for g in range(g_cap, 0, -1):
        if B % g == 0:
            return g
    return 1


def _vmem_limit_bytes():
    cap = 128 * 1024 * 1024
    try:
        info = pltpu.get_tpu_info()
        cap = int(getattr(info, "vmem_capacity_bytes", cap))
    except Exception:
        pass
    # Leave headroom for compiler-internal scratch + the x/out/attn pipeline
    # buffers: 85% of physical, capped at 100 MiB (v5e/v6e: 128 MiB, v7x: 64 MiB).
    return int(min(cap * 0.85, 100 * 1024 * 1024))


def _const_spec(shape):
    """Grid-invariant (weight/bias) spec, single-buffered to save VMEM."""
    nd = len(shape)
    imap = lambda b, _nd=nd: (0,) * _nd
    try:
        return pl.BlockSpec(shape, imap, pipeline_mode=pl.Buffered(1))
    except Exception:  # older API without pipeline_mode: fall back to default
        return pl.BlockSpec(shape, imap)


def block_forward(x, prepped, *, num_heads=NUM_HEADS, save_attn=True,
                  group_size=None, target_rows=None):
    B, N, C = x.shape
    H = num_heads
    assert C % H == 0, "dim must be divisible by num_heads"
    hidden = prepped["wfc1"].shape[1]
    cdtype = prepped["wqkv"].dtype

    # Only v7x has 2 TensorCores: keep >=2 grid steps there; elsewhere the grid
    # is a serial loop, so prefer one big step (bigger MXU M fill, less overhead).
    kind = ""
    try:
        kind = jax.devices()[0].device_kind.lower()
    except Exception:
        pass
    multi_tc = ("v7" in kind) or ("7x" in kind)
    if target_rows is None:
        target_rows = 256 if multi_tc else 512
    min_steps = 2 if multi_tc else 1

    G = group_size if group_size is not None else _pick_group_size(B, N, target_rows, min_steps)
    assert B % G == 0, "batch must be divisible by the group size"
    num_groups = B // G
    T = G * N

    in_specs = [
        pl.BlockSpec((G, N, C), lambda b: (b, 0, 0)),   # x: G batch elems / step
        _const_spec((C, 3 * C)),                        # wqkv (q-scale folded in)
        _const_spec((C, C)),                            # wproj
        _const_spec((1, C)),                            # bproj
        _const_spec((1, C)), _const_spec((1, C)),       # ln1 gamma/beta
        _const_spec((1, C)), _const_spec((1, C)),       # ln2 gamma/beta
        _const_spec((C, hidden)), _const_spec((1, hidden)),   # fc1 w/b
        _const_spec((hidden, C)), _const_spec((1, C)),        # fc2 w/b
    ]
    y_spec = pl.BlockSpec((G, N, C), lambda b: (b, 0, 0))
    y_shape = jax.ShapeDtypeStruct((B, N, C), x.dtype)
    if save_attn:
        # Attention probs saved in x.dtype; drop with save_attn=False to remove
        # this HBM writeback entirely.
        out_specs = (y_spec, pl.BlockSpec((G, H, N, N), lambda b: (b, 0, 0, 0)))
        out_shape = (y_shape, jax.ShapeDtypeStruct((B, H, N, N), x.dtype))
    else:
        out_specs = y_spec
        out_shape = y_shape

    scratch_shapes = [
        pltpu.VMEM((T, 3 * C), cdtype),   # fused QKV projection result
        pltpu.VMEM((T, C), cdtype),       # per-head contexts -> full-K proj matmul
    ]

    kernel = functools.partial(block_kernel, num_heads=H, save_attn=save_attn)
    result = pl.pallas_call(
        kernel,
        grid=(num_groups,),
        in_specs=in_specs,
        out_specs=out_specs,
        out_shape=out_shape,
        scratch_shapes=scratch_shapes,
        compiler_params=pltpu.CompilerParams(
            dimension_semantics=("parallel",),
            vmem_limit_bytes=_vmem_limit_bytes(),
        ),
    )(x, prepped["wqkv"], prepped["wproj"], prepped["bproj"],
      prepped["ln1g"], prepped["ln1b"], prepped["ln2g"], prepped["ln2b"],
      prepped["wfc1"], prepped["bfc1"], prepped["wfc2"], prepped["bfc2"])

    if save_attn:
        y, attn = result
        return y, attn
    return result, None


def block_reference(x, p, num_heads=NUM_HEADS):
    """Pure-JAX reference matching the PyTorch Block forward."""
    B, N, C = x.shape
    H = num_heads
    hd = C // H
    scale = hd ** (-0.5)

    def ln(v, g, b):
        mu = v.mean(-1, keepdims=True)
        var = ((v - mu) ** 2).mean(-1, keepdims=True)
        return (v - mu) / jnp.sqrt(var + LN_EPS) * g + b

    xn = ln(x, p["ln1g"][0], p["ln1b"][0])
    qkv = (xn @ p["wqkv"]).reshape(B, N, 3, H, hd).transpose(2, 0, 3, 1, 4)
    q, k, v = qkv[0] * scale, qkv[1], qkv[2]
    logits = jnp.einsum('bhnd,bhmd->bhnm', q, k)
    attn = jax.nn.softmax(logits, axis=-1)
    ctx = jnp.einsum('bhnm,bhmd->bhnd', attn, v).transpose(0, 2, 1, 3).reshape(B, N, C)
    t = ctx @ p["wproj"] + p["bproj"][0]
    x = x + t
    xn2 = ln(x, p["ln2g"][0], p["ln2b"][0])
    h1 = xn2 @ p["wfc1"] + p["bfc1"][0]
    h1 = 0.5 * h1 * (1.0 + lax.erf(h1 / math.sqrt(2.0)))
    m = h1 @ p["wfc2"] + p["bfc2"][0]
    return x + m, attn


if __name__ == "__main__":
    key = jax.random.PRNGKey(0)
    kx, kp = jax.random.split(key)
    B, N, C = 2, 8, 32
    x = jax.random.normal(kx, (B, N, C), jnp.float32)
    params = init_params(kp, C)
    prepped = prepare_block_params(params, num_heads=NUM_HEADS,
                                   compute_dtype=jnp.bfloat16)

    y, attn = block_forward(x, prepped, num_heads=NUM_HEADS, save_attn=True)
    jax.block_until_ready((y, attn))
    assert y.shape == (B, N, C)
    assert attn.shape == (B, NUM_HEADS, N, N)

    y_ref, attn_ref = block_reference(x, params)
    assert jnp.allclose(y, y_ref, rtol=2e-2, atol=2e-2)
    assert jnp.allclose(attn, attn_ref, rtol=2e-2, atol=2e-2)

    # Optional-output path (no attention-probability HBM writeback).
    y2, _ = block_forward(x, prepped, num_heads=NUM_HEADS, save_attn=False)
    jax.block_until_ready(y2)
    assert jnp.allclose(y2, y_ref, rtol=2e-2, atol=2e-2)

    print("KERNEL_OK")
</pallas_src>

<mosaic_0001>
module attributes {stable_mosaic.version = 11 : i64} {
  func.func @block_kernel(%arg0: i32, %arg1: memref<2x8x32xf32, #tpu.memory_space<vmem>>, %arg2: memref<32x96xbf16, #tpu.memory_space<vmem>>, %arg3: memref<32x32xbf16, #tpu.memory_space<vmem>>, %arg4: memref<1x32xf32, #tpu.memory_space<vmem>>, %arg5: memref<1x32xf32, #tpu.memory_space<vmem>>, %arg6: memref<1x32xf32, #tpu.memory_space<vmem>>, %arg7: memref<1x32xf32, #tpu.memory_space<vmem>>, %arg8: memref<1x32xf32, #tpu.memory_space<vmem>>, %arg9: memref<32x128xbf16, #tpu.memory_space<vmem>>, %arg10: memref<1x128xf32, #tpu.memory_space<vmem>>, %arg11: memref<128x32xbf16, #tpu.memory_space<vmem>>, %arg12: memref<1x32xf32, #tpu.memory_space<vmem>>, %arg13: memref<2x8x32xf32, #tpu.memory_space<vmem>>, %arg14: memref<2x4x8x8xf32, #tpu.memory_space<vmem>>, %arg15: memref<16x96xbf16, #tpu.memory_space<vmem>>, %arg16: memref<16x32xbf16, #tpu.memory_space<vmem>>) attributes {dimension_semantics = [#tpu.dimension_semantics<parallel>], iteration_bounds = array<i64: 1>, scalar_prefetch = 0 : i64, scratch_operands = 2 : i64, tpu.core_type = #tpu.core_type<tc>, window_params = [{transform_indices = @transform_0, window_bounds = array<i64: 2, 8, 32>}, {pipeline_mode = #tpu.pipeline_mode<synchronous>, transform_indices = @transform_1, window_bounds = array<i64: 32, 96>}, {pipeline_mode = #tpu.pipeline_mode<synchronous>, transform_indices = @transform_2, window_bounds = array<i64: 32, 32>}, {pipeline_mode = #tpu.pipeline_mode<synchronous>, transform_indices = @transform_3, window_bounds = array<i64: 1, 32>}, {pipeline_mode = #tpu.pipeline_mode<synchronous>, transform_indices = @transform_4, window_bounds = array<i64: 1, 32>}, {pipeline_mode = #tpu.pipeline_mode<synchronous>, transform_indices = @transform_5, window_bounds = array<i64: 1, 32>}, {pipeline_mode = #tpu.pipeline_mode<synchronous>, transform_indices = @transform_6, window_bounds = array<i64: 1, 32>}, {pipeline_mode = #tpu.pipeline_mode<synchronous>, transform_indices = @transform_7, window_bounds = array<i64: 1, 32>}, {pipeline_mode = #tpu.pipeline_mode<synchronous>, transform_indices = @transform_8, window_bounds = array<i64: 32, 128>}, {pipeline_mode = #tpu.pipeline_mode<synchronous>, transform_indices = @transform_9, window_bounds = array<i64: 1, 128>}, {pipeline_mode = #tpu.pipeline_mode<synchronous>, transform_indices = @transform_10, window_bounds = array<i64: 128, 32>}, {pipeline_mode = #tpu.pipeline_mode<synchronous>, transform_indices = @transform_11, window_bounds = array<i64: 1, 32>}, {transform_indices = @transform_12, window_bounds = array<i64: 2, 8, 32>}, {transform_indices = @transform_13, window_bounds = array<i64: 2, 4, 8, 8>}]} {
    %c0 = arith.constant 0 : index
    %c0_0 = arith.constant 0 : index
    %c0_1 = arith.constant 0 : index
    %0 = vector.load %arg1[%c0, %c0_0, %c0_1] : memref<2x8x32xf32, #tpu.memory_space<vmem>>, vector<2x8x32xf32>
    %1 = vector.shape_cast %0 : vector<2x8x32xf32> to vector<16x32xf32>
    %c0_2 = arith.constant 0 : index
    %c0_3 = arith.constant 0 : index
    %2 = vector.load %arg5[%c0_2, %c0_3] : memref<1x32xf32, #tpu.memory_space<vmem>>, vector<1x32xf32>
    %3 = vector.shape_cast %2 : vector<1x32xf32> to vector<32xf32>
    %c0_4 = arith.constant 0 : index
    %c0_5 = arith.constant 0 : index
    %4 = vector.load %arg6[%c0_4, %c0_5] : memref<1x32xf32, #tpu.memory_space<vmem>>, vector<1x32xf32>
    %5 = vector.shape_cast %4 : vector<1x32xf32> to vector<32xf32>
    %cst = arith.constant dense<0.000000e+00> : vector<16xf32>
    %6 = vector.multi_reduction <add>, %1, %cst [1] : vector<16x32xf32> to vector<16xf32>
    %7 = vector.shape_cast %6 : vector<16xf32> to vector<16x1xf32>
    %cst_6 = arith.constant 3.200000e+01 : f32
    %8 = vector.broadcast %cst_6 : f32 to vector<16x1xf32>
    %9 = arith.divf %7, %8 : vector<16x1xf32>
    %10 = vector.broadcast %9 : vector<16x1xf32> to vector<16x32xf32>
    %11 = arith.subf %1, %10 : vector<16x32xf32>
    %12 = arith.mulf %11, %11 : vector<16x32xf32>
    %cst_7 = arith.constant dense<0.000000e+00> : vector<16xf32>
    %13 = vector.multi_reduction <add>, %12, %cst_7 [1] : vector<16x32xf32> to vector<16xf32>
    %14 = vector.shape_cast %13 : vector<16xf32> to vector<16x1xf32>
    %cst_8 = arith.constant 3.200000e+01 : f32
    %15 = vector.broadcast %cst_8 : f32 to vector<16x1xf32>
    %16 = arith.divf %14, %15 : vector<16x1xf32>
    %cst_9 = arith.constant 9.99999974E-6 : f32
    %17 = vector.broadcast %cst_9 : f32 to vector<16x1xf32>
    %18 = arith.addf %16, %17 : vector<16x1xf32>
    %19 = math.rsqrt %18 : vector<16x1xf32>
    %20 = vector.broadcast %19 : vector<16x1xf32> to vector<16x32xf32>
    %21 = arith.mulf %11, %20 : vector<16x32xf32>
    %22 = vector.shape_cast %3 : vector<32xf32> to vector<1x32xf32>
    %23 = vector.broadcast %22 : vector<1x32xf32> to vector<16x32xf32>
    %24 = arith.mulf %21, %23 : vector<16x32xf32>
    %25 = vector.shape_cast %5 : vector<32xf32> to vector<1x32xf32>
    %26 = vector.broadcast %25 : vector<1x32xf32> to vector<16x32xf32>
    %27 = arith.addf %24, %26 : vector<16x32xf32>
    %28 = arith.truncf %27 : vector<16x32xf32> to vector<16x32xbf16>
    %c0_10 = arith.constant 0 : index
    %c0_11 = arith.constant 0 : index
    %29 = vector.load %arg2[%c0_10, %c0_11] : memref<32x96xbf16, #tpu.memory_space<vmem>>, vector<32x96xbf16>
    %cst_12 = arith.constant dense<0.000000e+00> : vector<16x96xf32>
    %30 = tpu.matmul %28, %29, %cst_12 {dimension_numbers = #tpu.dot_dimension_numbers<[1], [0], [0], [1], [0, 0, 1, 1], [], []>} : vector<16x32xbf16>, vector<32x96xbf16>, vector<16x96xf32> -> vector<16x96xf32>
    %31 = arith.truncf %30 : vector<16x96xf32> to vector<16x96xbf16>
    %c0_13 = arith.constant 0 : index
    %c0_14 = arith.constant 0 : index
    %32 = vector.load %arg15[%c0_13, %c0_14] : memref<16x96xbf16, #tpu.memory_space<vmem>>, vector<16x96xbf16>
    tpu.vector_store %arg15[%c0_13, %c0_14], %31 {strides = array<i32>} : memref<16x96xbf16, #tpu.memory_space<vmem>>, vector<16x96xbf16>,
    %c0_15 = arith.constant 0 : index
    %c0_16 = arith.constant 0 : index
    %33 = vector.load %arg15[%c0_15, %c0_16] : memref<16x96xbf16, #tpu.memory_space<vmem>>, vector<16x8xbf16>
    %34 = vector.shape_cast %33 : vector<16x8xbf16> to vector<2x8x8xbf16>
    %c0_17 = arith.constant 0 : index
    %c32 = arith.constant 32 : index
    %35 = vector.load %arg15[%c0_17, %c32] : memref<16x96xbf16, #tpu.memory_space<vmem>>, vector<16x8xbf16>
    %36 = vector.shape_cast %35 : vector<16x8xbf16> to vector<2x8x8xbf16>
    %c0_18 = arith.constant 0 : index
    %c64 = arith.constant 64 : index
    %37 = vector.load %arg15[%c0_18, %c64] : memref<16x96xbf16, #tpu.memory_space<vmem>>, vector<16x8xbf16>
    %38 = vector.shape_cast %37 : vector<16x8xbf16> to vector<2x8x8xbf16>
    "tpu.trace_start"() <{level = 10 : i32, message = "gnd,gmd->gnm"}> : () -> ()
    %cst_19 = arith.constant dense<0.000000e+00> : vector<2x8x8xf32>
    %39 = tpu.matmul %34, %36, %cst_19 {dimension_numbers = #tpu.dot_dimension_numbers<[2], [2], [1], [1], [0, 0, 0, 1, 1, 1], [0], [0]>} : vector<2x8x8xbf16>, vector<2x8x8xbf16>, vector<2x8x8xf32> -> vector<2x8x8xf32>
    "tpu.trace_stop"() : () -> ()
    %cst_20 = arith.constant dense<0xFF800000> : vector<2x8xf32>
    %40 = vector.multi_reduction <maximumf>, %39, %cst_20 [2] : vector<2x8x8xf32> to vector<2x8xf32>
    %41 = vector.shape_cast %40 : vector<2x8xf32> to vector<2x8x1xf32>
    %42 = vector.broadcast %41 : vector<2x8x1xf32> to vector<2x8x8xf32>
    %43 = arith.subf %39, %42 : vector<2x8x8xf32>
    %44 = math.exp %43 : vector<2x8x8xf32>
    %cst_21 = arith.constant dense<0.000000e+00> : vector<2x8xf32>
    %45 = vector.multi_reduction <add>, %44, %cst_21 [2] : vector<2x8x8xf32> to vector<2x8xf32>
    %46 = vector.shape_cast %45 : vector<2x8xf32> to vector<2x8x1xf32>
    %47 = tpu.reciprocal %46 : vector<2x8x1xf32> -> vector<2x8x1xf32>
    %48 = vector.broadcast %47 : vector<2x8x1xf32> to vector<2x8x8xf32>
    %49 = arith.mulf %44, %48 : vector<2x8x8xf32>
    %c0_22 = arith.constant 0 : index
    %c0_23 = arith.constant 0 : index
    %c0_24 = arith.constant 0 : index
    %c0_25 = arith.constant 0 : index
    %50 = vector.load %arg14[%c0_22, %c0_23, %c0_24, %c0_25] : memref<2x4x8x8xf32, #tpu.memory_space<vmem>>, vector<2x1x8x8xf32>
    %51 = vector.shape_cast %50 : vector<2x1x8x8xf32> to vector<2x8x8xf32>
    %52 = vector.shape_cast %49 : vector<2x8x8xf32> to vector<2x1x8x8xf32>
    tpu.vector_store %arg14[%c0_22, %c0_23, %c0_24, %c0_25], %52 {strides = array<i32>} : memref<2x4x8x8xf32, #tpu.memory_space<vmem>>, vector<2x1x8x8xf32>,
    %53 = arith.truncf %49 : vector<2x8x8xf32> to vector<2x8x8xbf16>
    "tpu.trace_start"() <{level = 10 : i32, message = "gnm,gmd->gnd"}> : () -> ()
    %cst_26 = arith.constant dense<0.000000e+00> : vector<2x8x8xf32>
    %54 = tpu.matmul %53, %38, %cst_26 {dimension_numbers = #tpu.dot_dimension_numbers<[2], [1], [1], [2], [0, 0, 0, 1, 1, 2], [0], [0]>} : vector<2x8x8xbf16>, vector<2x8x8xbf16>, vector<2x8x8xf32> -> vector<2x8x8xf32>
    "tpu.trace_stop"() : () -> ()
    %55 = vector.shape_cast %54 : vector<2x8x8xf32> to vector<16x8xf32>
    %56 = arith.truncf %55 : vector<16x8xf32> to vector<16x8xbf16>
    %c0_27 = arith.constant 0 : index
    %c0_28 = arith.constant 0 : index
    %57 = vector.load %arg16[%c0_27, %c0_28] : memref<16x32xbf16, #tpu.memory_space<vmem>>, vector<16x8xbf16>
    tpu.vector_store %arg16[%c0_27, %c0_28], %56 {strides = array<i32>} : memref<16x32xbf16, #tpu.memory_space<vmem>>, vector<16x8xbf16>,
    %c0_29 = arith.constant 0 : index
    %c8 = arith.constant 8 : index
    %58 = vector.load %arg15[%c0_29, %c8] : memref<16x96xbf16, #tpu.memory_space<vmem>>, vector<16x8xbf16>
    %59 = vector.shape_cast %58 : vector<16x8xbf16> to vector<2x8x8xbf16>
    %c0_30 = arith.constant 0 : index
    %c40 = arith.constant 40 : index
    %60 = vector.load %arg15[%c0_30, %c40] : memref<16x96xbf16, #tpu.memory_space<vmem>>, vector<16x8xbf16>
    %61 = vector.shape_cast %60 : vector<16x8xbf16> to vector<2x8x8xbf16>
    %c0_31 = arith.constant 0 : index
    %c72 = arith.constant 72 : index
    %62 = vector.load %arg15[%c0_31, %c72] : memref<16x96xbf16, #tpu.memory_space<vmem>>, vector<16x8xbf16>
    %63 = vector.shape_cast %62 : vector<16x8xbf16> to vector<2x8x8xbf16>
    "tpu.trace_start"() <{level = 10 : i32, message = "gnd,gmd->gnm"}> : () -> ()
    %cst_32 = arith.constant dense<0.000000e+00> : vector<2x8x8xf32>
    %64 = tpu.matmul %59, %61, %cst_32 {dimension_numbers = #tpu.dot_dimension_numbers<[2], [2], [1], [1], [0, 0, 0, 1, 1, 1], [0], [0]>} : vector<2x8x8xbf16>, vector<2x8x8xbf16>, vector<2x8x8xf32> -> vector<2x8x8xf32>
    "tpu.trace_stop"() : () -> ()
    %cst_33 = arith.constant dense<0xFF800000> : vector<2x8xf32>
    %65 = vector.multi_reduction <maximumf>, %64, %cst_33 [2] : vector<2x8x8xf32> to vector<2x8xf32>
    %66 = vector.shape_cast %65 : vector<2x8xf32> to vector<2x8x1xf32>
    %67 = vector.broadcast %66 : vector<2x8x1xf32> to vector<2x8x8xf32>
    %68 = arith.subf %64, %67 : vector<2x8x8xf32>
    %69 = math.exp %68 : vector<2x8x8xf32>
    %cst_34 = arith.constant dense<0.000000e+00> : vector<2x8xf32>
    %70 = vector.multi_reduction <add>, %69, %cst_34 [2] : vector<2x8x8xf32> to vector<2x8xf32>
    %71 = vector.shape_cast %70 : vector<2x8xf32> to vector<2x8x1xf32>
    %72 = tpu.reciprocal %71 : vector<2x8x1xf32> -> vector<2x8x1xf32>
    %73 = vector.broadcast %72 : vector<2x8x1xf32> to vector<2x8x8xf32>
    %74 = arith.mulf %69, %73 : vector<2x8x8xf32>
    %c0_35 = arith.constant 0 : index
    %c1 = arith.constant 1 : index
    %c0_36 = arith.constant 0 : index
    %c0_37 = arith.constant 0 : index
    %75 = vector.load %arg14[%c0_35, %c1, %c0_36, %c0_37] : memref<2x4x8x8xf32, #tpu.memory_space<vmem>>, vector<2x1x8x8xf32>
    %76 = vector.shape_cast %75 : vector<2x1x8x8xf32> to vector<2x8x8xf32>
    %77 = vector.shape_cast %74 : vector<2x8x8xf32> to vector<2x1x8x8xf32>
    tpu.vector_store %arg14[%c0_35, %c1, %c0_36, %c0_37], %77 {strides = array<i32>} : memref<2x4x8x8xf32, #tpu.memory_space<vmem>>, vector<2x1x8x8xf32>,
    %78 = arith.truncf %74 : vector<2x8x8xf32> to vector<2x8x8xbf16>
    "tpu.trace_start"() <{level = 10 : i32, message = "gnm,gmd->gnd"}> : () -> ()
    %cst_38 = arith.constant dense<0.000000e+00> : vector<2x8x8xf32>
    %79 = tpu.matmul %78, %63, %cst_38 {dimension_numbers = #tpu.dot_dimension_numbers<[2], [1], [1], [2], [0, 0, 0, 1, 1, 2], [0], [0]>} : vector<2x8x8xbf16>, vector<2x8x8xbf16>, vector<2x8x8xf32> -> vector<2x8x8xf32>
    "tpu.trace_stop"() : () -> ()
    %80 = vector.shape_cast %79 : vector<2x8x8xf32> to vector<16x8xf32>
    %81 = arith.truncf %80 : vector<16x8xf32> to vector<16x8xbf16>
    %c0_39 = arith.constant 0 : index
    %c8_40 = arith.constant 8 : index
    %82 = vector.load %arg16[%c0_39, %c8_40] : memref<16x32xbf16, #tpu.memory_space<vmem>>, vector<16x8xbf16>
    tpu.vector_store %arg16[%c0_39, %c8_40], %81 {strides = array<i32>} : memref<16x32xbf16, #tpu.memory_space<vmem>>, vector<16x8xbf16>,
    %c0_41 = arith.constant 0 : index
    %c16 = arith.constant 16 : index
    %83 = vector.load %arg15[%c0_41, %c16] : memref<16x96xbf16, #tpu.memory_space<vmem>>, vector<16x8xbf16>
    %84 = vector.shape_cast %83 : vector<16x8xbf16> to vector<2x8x8xbf16>
    %c0_42 = arith.constant 0 : index
    %c48 = arith.constant 48 : index
    %85 = vector.load %arg15[%c0_42, %c48] : memref<16x96xbf16, #tpu.memory_space<vmem>>, vector<16x8xbf16>
    %86 = vector.shape_cast %85 : vector<16x8xbf16> to vector<2x8x8xbf16>
    %c0_43 = arith.constant 0 : index
    %c80 = arith.constant 80 : index
    %87 = vector.load %arg15[%c0_43, %c80] : memref<16x96xbf16, #tpu.memory_space<vmem>>, vector<16x8xbf16>
    %88 = vector.shape_cast %87 : vector<16x8xbf16> to vector<2x8x8xbf16>
    "tpu.trace_start"() <{level = 10 : i32, message = "gnd,gmd->gnm"}> : () -> ()
    %cst_44 = arith.constant dense<0.000000e+00> : vector<2x8x8xf32>
    %89 = tpu.matmul %84, %86, %cst_44 {dimension_numbers = #tpu.dot_dimension_numbers<[2], [2], [1], [1], [0, 0, 0, 1, 1, 1], [0], [0]>} : vector<2x8x8xbf16>, vector<2x8x8xbf16>, vector<2x8x8xf32> -> vector<2x8x8xf32>
    "tpu.trace_stop"() : () -> ()
    %cst_45 = arith.constant dense<0xFF800000> : vector<2x8xf32>
    %90 = vector.multi_reduction <maximumf>, %89, %cst_45 [2] : vector<2x8x8xf32> to vector<2x8xf32>
    %91 = vector.shape_cast %90 : vector<2x8xf32> to vector<2x8x1xf32>
    %92 = vector.broadcast %91 : vector<2x8x1xf32> to vector<2x8x8xf32>
    %93 = arith.subf %89, %92 : vector<2x8x8xf32>
    %94 = math.exp %93 : vector<2x8x8xf32>
    %cst_46 = arith.constant dense<0.000000e+00> : vector<2x8xf32>
    %95 = vector.multi_reduction <add>, %94, %cst_46 [2] : vector<2x8x8xf32> to vector<2x8xf32>
    %96 = vector.shape_cast %95 : vector<2x8xf32> to vector<2x8x1xf32>
    %97 = tpu.reciprocal %96 : vector<2x8x1xf32> -> vector<2x8x1xf32>
    %98 = vector.broadcast %97 : vector<2x8x1xf32> to vector<2x8x8xf32>
    %99 = arith.mulf %94, %98 : vector<2x8x8xf32>
    %c0_47 = arith.constant 0 : index
    %c2 = arith.constant 2 : index
    %c0_48 = arith.constant 0 : index
    %c0_49 = arith.constant 0 : index
    %100 = vector.load %arg14[%c0_47, %c2, %c0_48, %c0_49] : memref<2x4x8x8xf32, #tpu.memory_space<vmem>>, vector<2x1x8x8xf32>
    %101 = vector.shape_cast %100 : vector<2x1x8x8xf32> to vector<2x8x8xf32>
    %102 = vector.shape_cast %99 : vector<2x8x8xf32> to vector<2x1x8x8xf32>
    tpu.vector_store %arg14[%c0_47, %c2, %c0_48, %c0_49], %102 {strides = array<i32>} : memref<2x4x8x8xf32, #tpu.memory_space<vmem>>, vector<2x1x8x8xf32>,
    %103 = arith.truncf %99 : vector<2x8x8xf32> to vector<2x8x8xbf16>
    "tpu.trace_start"() <{level = 10 : i32, message = "gnm,gmd->gnd"}> : () -> ()
    %cst_50 = arith.constant dense<0.000000e+00> : vector<2x8x8xf32>
    %104 = tpu.matmul %103, %88, %cst_50 {dimension_numbers = #tpu.dot_dimension_numbers<[2], [1], [1], [2], [0, 0, 0, 1, 1, 2], [0], [0]>} : vector<2x8x8xbf16>, vector<2x8x8xbf16>, vector<2x8x8xf32> -> vector<2x8x8xf32>
    "tpu.trace_stop"() : () -> ()
    %105 = vector.shape_cast %104 : vector<2x8x8xf32> to vector<16x8xf32>
    %106 = arith.truncf %105 : vector<16x8xf32> to vector<16x8xbf16>
    %c0_51 = arith.constant 0 : index
    %c16_52 = arith.constant 16 : index
    %107 = vector.load %arg16[%c0_51, %c16_52] : memref<16x32xbf16, #tpu.memory_space<vmem>>, vector<16x8xbf16>
    tpu.vector_store %arg16[%c0_51, %c16_52], %106 {strides = array<i32>} : memref<16x32xbf16, #tpu.memory_space<vmem>>, vector<16x8xbf16>,
    %c0_53 = arith.constant 0 : index
    %c24 = arith.constant 24 : index
    %108 = vector.load %arg15[%c0_53, %c24] : memref<16x96xbf16, #tpu.memory_space<vmem>>, vector<16x8xbf16>
    %109 = vector.shape_cast %108 : vector<16x8xbf16> to vector<2x8x8xbf16>
    %c0_54 = arith.constant 0 : index
    %c56 = arith.constant 56 : index
    %110 = vector.load %arg15[%c0_54, %c56] : memref<16x96xbf16, #tpu.memory_space<vmem>>, vector<16x8xbf16>
    %111 = vector.shape_cast %110 : vector<16x8xbf16> to vector<2x8x8xbf16>
    %c0_55 = arith.constant 0 : index
    %c88 = arith.constant 88 : index
    %112 = vector.load %arg15[%c0_55, %c88] : memref<16x96xbf16, #tpu.memory_space<vmem>>, vector<16x8xbf16>
    %113 = vector.shape_cast %112 : vector<16x8xbf16> to vector<2x8x8xbf16>
    "tpu.trace_start"() <{level = 10 : i32, message = "gnd,gmd->gnm"}> : () -> ()
    %cst_56 = arith.constant dense<0.000000e+00> : vector<2x8x8xf32>
    %114 = tpu.matmul %109, %111, %cst_56 {dimension_numbers = #tpu.dot_dimension_numbers<[2], [2], [1], [1], [0, 0, 0, 1, 1, 1], [0], [0]>} : vector<2x8x8xbf16>, vector<2x8x8xbf16>, vector<2x8x8xf32> -> vector<2x8x8xf32>
    "tpu.trace_stop"() : () -> ()
    %cst_57 = arith.constant dense<0xFF800000> : vector<2x8xf32>
    %115 = vector.multi_reduction <maximumf>, %114, %cst_57 [2] : vector<2x8x8xf32> to vector<2x8xf32>
    %116 = vector.shape_cast %115 : vector<2x8xf32> to vector<2x8x1xf32>
    %117 = vector.broadcast %116 : vector<2x8x1xf32> to vector<2x8x8xf32>
    %118 = arith.subf %114, %117 : vector<2x8x8xf32>
    %119 = math.exp %118 : vector<2x8x8xf32>
    %cst_58 = arith.constant dense<0.000000e+00> : vector<2x8xf32>
    %120 = vector.multi_reduction <add>, %119, %cst_58 [2] : vector<2x8x8xf32> to vector<2x8xf32>
    %121 = vector.shape_cast %120 : vector<2x8xf32> to vector<2x8x1xf32>
    %122 = tpu.reciprocal %121 : vector<2x8x1xf32> -> vector<2x8x1xf32>
    %123 = vector.broadcast %122 : vector<2x8x1xf32> to vector<2x8x8xf32>
    %124 = arith.mulf %119, %123 : vector<2x8x8xf32>
    %c0_59 = arith.constant 0 : index
    %c3 = arith.constant 3 : index
    %c0_60 = arith.constant 0 : index
    %c0_61 = arith.constant 0 : index
    %125 = vector.load %arg14[%c0_59, %c3, %c0_60, %c0_61] : memref<2x4x8x8xf32, #tpu.memory_space<vmem>>, vector<2x1x8x8xf32>
    %126 = vector.shape_cast %125 : vector<2x1x8x8xf32> to vector<2x8x8xf32>
    %127 = vector.shape_cast %124 : vector<2x8x8xf32> to vector<2x1x8x8xf32>
    tpu.vector_store %arg14[%c0_59, %c3, %c0_60, %c0_61], %127 {strides = array<i32>} : memref<2x4x8x8xf32, #tpu.memory_space<vmem>>, vector<2x1x8x8xf32>,
    %128 = arith.truncf %124 : vector<2x8x8xf32> to vector<2x8x8xbf16>
    "tpu.trace_start"() <{level = 10 : i32, message = "gnm,gmd->gnd"}> : () -> ()
    %cst_62 = arith.constant dense<0.000000e+00> : vector<2x8x8xf32>
    %129 = tpu.matmul %128, %113, %cst_62 {dimension_numbers = #tpu.dot_dimension_numbers<[2], [1], [1], [2], [0, 0, 0, 1, 1, 2], [0], [0]>} : vector<2x8x8xbf16>, vector<2x8x8xbf16>, vector<2x8x8xf32> -> vector<2x8x8xf32>
    "tpu.trace_stop"() : () -> ()
    %130 = vector.shape_cast %129 : vector<2x8x8xf32> to vector<16x8xf32>
    %131 = arith.truncf %130 : vector<16x8xf32> to vector<16x8xbf16>
    %c0_63 = arith.constant 0 : index
    %c24_64 = arith.constant 24 : index
    %132 = vector.load %arg16[%c0_63, %c24_64] : memref<16x32xbf16, #tpu.memory_space<vmem>>, vector<16x8xbf16>
    tpu.vector_store %arg16[%c0_63, %c24_64], %131 {strides = array<i32>} : memref<16x32xbf16, #tpu.memory_space<vmem>>, vector<16x8xbf16>,
    %c0_65 = arith.constant 0 : index
    %c0_66 = arith.constant 0 : index
    %133 = vector.load %arg16[%c0_65, %c0_66] : memref<16x32xbf16, #tpu.memory_space<vmem>>, vector<16x32xbf16>
    %c0_67 = arith.constant 0 : index
    %c0_68 = arith.constant 0 : index
    %134 = vector.load %arg3[%c0_67, %c0_68] : memref<32x32xbf16, #tpu.memory_space<vmem>>, vector<32x32xbf16>
    %cst_69 = arith.constant dense<0.000000e+00> : vector<16x32xf32>
    %135 = tpu.matmul %133, %134, %cst_69 {dimension_numbers = #tpu.dot_dimension_numbers<[1], [0], [0], [1], [0, 0, 1, 1], [], []>} : vector<16x32xbf16>, vector<32x32xbf16>, vector<16x32xf32> -> vector<16x32xf32>
    %c0_70 = arith.constant 0 : index
    %c0_71 = arith.constant 0 : index
    %136 = vector.load %arg4[%c0_70, %c0_71] : memref<1x32xf32, #tpu.memory_space<vmem>>, vector<1x32xf32>
    %137 = vector.shape_cast %136 : vector<1x32xf32> to vector<32xf32>
    %138 = vector.shape_cast %137 : vector<32xf32> to vector<1x32xf32>
    %139 = vector.broadcast %138 : vector<1x32xf32> to vector<16x32xf32>
    %140 = arith.addf %135, %139 : vector<16x32xf32>
    %141 = arith.addf %1, %140 : vector<16x32xf32>
    %c0_72 = arith.constant 0 : index
    %c0_73 = arith.constant 0 : index
    %142 = vector.load %arg7[%c0_72, %c0_73] : memref<1x32xf32, #tpu.memory_space<vmem>>, vector<1x32xf32>
    %143 = vector.shape_cast %142 : vector<1x32xf32> to vector<32xf32>
    %c0_74 = arith.constant 0 : index
    %c0_75 = arith.constant 0 : index
    %144 = vector.load %arg8[%c0_74, %c0_75] : memref<1x32xf32, #tpu.memory_space<vmem>>, vector<1x32xf32>
    %145 = vector.shape_cast %144 : vector<1x32xf32> to vector<32xf32>
    %cst_76 = arith.constant dense<0.000000e+00> : vector<16xf32>
    %146 = vector.multi_reduction <add>, %141, %cst_76 [1] : vector<16x32xf32> to vector<16xf32>
    %147 = vector.shape_cast %146 : vector<16xf32> to vector<16x1xf32>
    %cst_77 = arith.constant 3.200000e+01 : f32
    %148 = vector.broadcast %cst_77 : f32 to vector<16x1xf32>
    %149 = arith.divf %147, %148 : vector<16x1xf32>
    %150 = vector.broadcast %149 : vector<16x1xf32> to vector<16x32xf32>
    %151 = arith.subf %141, %150 : vector<16x32xf32>
    %152 = arith.mulf %151, %151 : vector<16x32xf32>
    %cst_78 = arith.constant dense<0.000000e+00> : vector<16xf32>
    %153 = vector.multi_reduction <add>, %152, %cst_78 [1] : vector<16x32xf32> to vector<16xf32>
    %154 = vector.shape_cast %153 : vector<16xf32> to vector<16x1xf32>
    %cst_79 = arith.constant 3.200000e+01 : f32
    %155 = vector.broadcast %cst_79 : f32 to vector<16x1xf32>
    %156 = arith.divf %154, %155 : vector<16x1xf32>
    %cst_80 = arith.constant 9.99999974E-6 : f32
    %157 = vector.broadcast %cst_80 : f32 to vector<16x1xf32>
    %158 = arith.addf %156, %157 : vector<16x1xf32>
    %159 = math.rsqrt %158 : vector<16x1xf32>
    %160 = vector.broadcast %159 : vector<16x1xf32> to vector<16x32xf32>
    %161 = arith.mulf %151, %160 : vector<16x32xf32>
    %162 = vector.shape_cast %143 : vector<32xf32> to vector<1x32xf32>
    %163 = vector.broadcast %162 : vector<1x32xf32> to vector<16x32xf32>
    %164 = arith.mulf %161, %163 : vector<16x32xf32>
    %165 = vector.shape_cast %145 : vector<32xf32> to vector<1x32xf32>
    %166 = vector.broadcast %165 : vector<1x32xf32> to vector<16x32xf32>
    %167 = arith.addf %164, %166 : vector<16x32xf32>
    %168 = arith.truncf %167 : vector<16x32xf32> to vector<16x32xbf16>
    %c0_81 = arith.constant 0 : index
    %c0_82 = arith.constant 0 : index
    %169 = vector.load %arg9[%c0_81, %c0_82] : memref<32x128xbf16, #tpu.memory_space<vmem>>, vector<32x128xbf16>
    %cst_83 = arith.constant dense<0.000000e+00> : vector<16x128xf32>
    %170 = tpu.matmul %168, %169, %cst_83 {dimension_numbers = #tpu.dot_dimension_numbers<[1], [0], [0], [1], [0, 0, 1, 1], [], []>} : vector<16x32xbf16>, vector<32x128xbf16>, vector<16x128xf32> -> vector<16x128xf32>
    %c0_84 = arith.constant 0 : index
    %c0_85 = arith.constant 0 : index
    %171 = vector.load %arg10[%c0_84, %c0_85] : memref<1x128xf32, #tpu.memory_space<vmem>>, vector<1x128xf32>
    %172 = vector.shape_cast %171 : vector<1x128xf32> to vector<128xf32>
    %173 = vector.shape_cast %172 : vector<128xf32> to vector<1x128xf32>
    %174 = vector.broadcast %173 : vector<1x128xf32> to vector<16x128xf32>
    %175 = arith.addf %170, %174 : vector<16x128xf32>
    %cst_86 = arith.constant 5.000000e-01 : f32
    %176 = vector.broadcast %cst_86 : f32 to vector<16x128xf32>
    %177 = arith.mulf %176, %175 : vector<16x128xf32>
    %cst_87 = arith.constant 0.707106769 : f32
    %178 = vector.broadcast %cst_87 : f32 to vector<16x128xf32>
    %179 = arith.mulf %175, %178 : vector<16x128xf32>
    %180 = math.erf %179 : vector<16x128xf32>
    %cst_88 = arith.constant 1.000000e+00 : f32
    %181 = vector.broadcast %cst_88 : f32 to vector<16x128xf32>
    %182 = arith.addf %181, %180 : vector<16x128xf32>
    %183 = arith.mulf %177, %182 : vector<16x128xf32>
    %184 = arith.truncf %183 : vector<16x128xf32> to vector<16x128xbf16>
    %c0_89 = arith.constant 0 : index
    %c0_90 = arith.constant 0 : index
    %185 = vector.load %arg11[%c0_89, %c0_90] : memref<128x32xbf16, #tpu.memory_space<vmem>>, vector<128x32xbf16>
    %cst_91 = arith.constant dense<0.000000e+00> : vector<16x32xf32>
    %186 = tpu.matmul %184, %185, %cst_91 {dimension_numbers = #tpu.dot_dimension_numbers<[1], [0], [0], [1], [0, 0, 1, 1], [], []>} : vector<16x128xbf16>, vector<128x32xbf16>, vector<16x32xf32> -> vector<16x32xf32>
    %c0_92 = arith.constant 0 : index
    %c0_93 = arith.constant 0 : index
    %187 = vector.load %arg12[%c0_92, %c0_93] : memref<1x32xf32, #tpu.memory_space<vmem>>, vector<1x32xf32>
    %188 = vector.shape_cast %187 : vector<1x32xf32> to vector<32xf32>
    %189 = vector.shape_cast %188 : vector<32xf32> to vector<1x32xf32>
    %190 = vector.broadcast %189 : vector<1x32xf32> to vector<16x32xf32>
    %191 = arith.addf %186, %190 : vector<16x32xf32>
    %192 = arith.addf %141, %191 : vector<16x32xf32>
    %193 = vector.shape_cast %192 : vector<16x32xf32> to vector<2x8x32xf32>
    %c0_94 = arith.constant 0 : index
    %c0_95 = arith.constant 0 : index
    %c0_96 = arith.constant 0 : index
    %194 = vector.load %arg13[%c0_94, %c0_95, %c0_96] : memref<2x8x32xf32, #tpu.memory_space<vmem>>, vector<2x8x32xf32>
    tpu.vector_store %arg13[%c0_94, %c0_95, %c0_96], %193 {strides = array<i32>} : memref<2x8x32xf32, #tpu.memory_space<vmem>>, vector<2x8x32xf32>,
    return
  }
  func.func @transform_0(%arg0: i32) -> (i32, i32, i32) {
    %c0_i32 = arith.constant 0 : i32
    %c0_i32_0 = arith.constant 0 : i32
    %c0_i32_1 = arith.constant 0 : i32
    return %arg0, %c0_i32, %c0_i32_0 : i32, i32, i32
  }
  func.func @transform_1(%arg0: i32) -> (i32, i32) {
    %c0_i32 = arith.constant 0 : i32
    %c0_i32_0 = arith.constant 0 : i32
    %c0_i32_1 = arith.constant 0 : i32
    return %c0_i32, %c0_i32_0 : i32, i32
  }
  func.func @transform_2(%arg0: i32) -> (i32, i32) {
    %c0_i32 = arith.constant 0 : i32
    %c0_i32_0 = arith.constant 0 : i32
    %c0_i32_1 = arith.constant 0 : i32
    return %c0_i32, %c0_i32_0 : i32, i32
  }
  func.func @transform_3(%arg0: i32) -> (i32, i32) {
    %c0_i32 = arith.constant 0 : i32
    %c0_i32_0 = arith.constant 0 : i32
    %c0_i32_1 = arith.constant 0 : i32
    return %c0_i32, %c0_i32_0 : i32, i32
  }
  func.func @transform_4(%arg0: i32) -> (i32, i32) {
    %c0_i32 = arith.constant 0 : i32
    %c0_i32_0 = arith.constant 0 : i32
    %c0_i32_1 = arith.constant 0 : i32
    return %c0_i32, %c0_i32_0 : i32, i32
  }
  func.func @transform_5(%arg0: i32) -> (i32, i32) {
    %c0_i32 = arith.constant 0 : i32
    %c0_i32_0 = arith.constant 0 : i32
    %c0_i32_1 = arith.constant 0 : i32
    return %c0_i32, %c0_i32_0 : i32, i32
  }
  func.func @transform_6(%arg0: i32) -> (i32, i32) {
    %c0_i32 = arith.constant 0 : i32
    %c0_i32_0 = arith.constant 0 : i32
    %c0_i32_1 = arith.constant 0 : i32
    return %c0_i32, %c0_i32_0 : i32, i32
  }
  func.func @transform_7(%arg0: i32) -> (i32, i32) {
    %c0_i32 = arith.constant 0 : i32
    %c0_i32_0 = arith.constant 0 : i32
    %c0_i32_1 = arith.constant 0 : i32
    return %c0_i32, %c0_i32_0 : i32, i32
  }
  func.func @transform_8(%arg0: i32) -> (i32, i32) {
    %c0_i32 = arith.constant 0 : i32
    %c0_i32_0 = arith.constant 0 : i32
    %c0_i32_1 = arith.constant 0 : i32
    return %c0_i32, %c0_i32_0 : i32, i32
  }
  func.func @transform_9(%arg0: i32) -> (i32, i32) {
    %c0_i32 = arith.constant 0 : i32
    %c0_i32_0 = arith.constant 0 : i32
    %c0_i32_1 = arith.constant 0 : i32
    return %c0_i32, %c0_i32_0 : i32, i32
  }
  func.func @transform_10(%arg0: i32) -> (i32, i32) {
    %c0_i32 = arith.constant 0 : i32
    %c0_i32_0 = arith.constant 0 : i32
    %c0_i32_1 = arith.constant 0 : i32
    return %c0_i32, %c0_i32_0 : i32, i32
  }
  func.func @transform_11(%arg0: i32) -> (i32, i32) {
    %c0_i32 = arith.constant 0 : i32
    %c0_i32_0 = arith.constant 0 : i32
    %c0_i32_1 = arith.constant 0 : i32
    return %c0_i32, %c0_i32_0 : i32, i32
  }
  func.func @transform_12(%arg0: i32) -> (i32, i32, i32) {
    %c0_i32 = arith.constant 0 : i32
    %c0_i32_0 = arith.constant 0 : i32
    %c0_i32_1 = arith.constant 0 : i32
    return %arg0, %c0_i32, %c0_i32_0 : i32, i32, i32
  }
  func.func @transform_13(%arg0: i32) -> (i32, i32, i32, i32) {
    %c0_i32 = arith.constant 0 : i32
    %c0_i32_0 = arith.constant 0 : i32
    %c0_i32_1 = arith.constant 0 : i32
    %c0_i32_2 = arith.constant 0 : i32
    return %arg0, %c0_i32, %c0_i32_0, %c0_i32_1 : i32, i32, i32, i32
  }
}

</mosaic_0001>

<llo_original>
// kernel: tpu_custom_call.1
$region0: #{tpu_custom_call.1}
  #allocation0 [shape = 'u32[]', space=smem, size = 0x4, offset = 0x4, fixed_abs, tag = 'smem constant byte address 0x4 - core index']
  #allocation1 [shape = 'u32[144,128]{1,0:T(1,128)}', space=vmem, size = 0x12000, scoped, tag = 'internal scratch']
  #allocation2 [shape = 'bf16[16,96]{1,0:T(16,128)(2,1)}', space=vmem, size = 0x1000, scoped, tag = 'scratch operand']
  #allocation3 [shape = 'bf16[16,32]{1,0:T(16,128)(2,1)}', space=vmem, size = 0x1000, scoped, tag = 'scratch operand']
  %s0 = inlined_call_operand.hbm [shape: f32[2,8,32], index: 0, kind: input, shape index: {}]
  %s1 = inlined_call_operand.hbm [shape: bf16[32,96], index: 1, kind: input, shape index: {}]
  %s2 = inlined_call_operand.hbm [shape: bf16[32,32], index: 2, kind: input, shape index: {}]
  %s3 = inlined_call_operand.hbm [shape: f32[1,32], index: 3, kind: input, shape index: {}]
  %s4 = inlined_call_operand.hbm [shape: f32[1,32], index: 4, kind: input, shape index: {}]
  %s5 = inlined_call_operand.hbm [shape: f32[1,32], index: 5, kind: input, shape index: {}]
  %s6 = inlined_call_operand.hbm [shape: f32[1,32], index: 6, kind: input, shape index: {}]
  %s7 = inlined_call_operand.hbm [shape: f32[1,32], index: 7, kind: input, shape index: {}]
  %s8 = inlined_call_operand.hbm [shape: bf16[32,128], index: 8, kind: input, shape index: {}]
  %s9 = inlined_call_operand.hbm [shape: f32[1,128], index: 9, kind: input, shape index: {}]
  %s10 = inlined_call_operand.hbm [shape: bf16[128,32], index: 10, kind: input, shape index: {}]
  %s11 = inlined_call_operand.hbm [shape: f32[1,32], index: 11, kind: input, shape index: {}]
  %s12 = inlined_call_operand.hbm [shape: f32[2,8,32], index: 12, kind: output, shape index: {0}]
  %s13 = inlined_call_operand.hbm [shape: f32[2,4,8,8], index: 13, kind: output, shape index: {1}]
  %14 = xla_tuple %s12, %s13
  %s15 = sld [smem:[#allocation0]]
  $region114: #{tpu_custom_call.1} parent=0
    _
  %s17 = ssub.s32 1, %s15
  %s18 = scalar_select 0, %s17, %s15
  $region1: #{tpu_custom_call.1} parent=0
    #allocation4 [shape = 'u8[8192]{0}', space=vmem, size = 0x2000, scoped, tag = 'input window, operand 0, single buffered']
    #allocation5 [shape = 's32[1]{0}', space=sflag, size = 0x4, scoped, tag = 'scoped memory for tpu_custom_call.1']
    #allocation6 [shape = 's32[1]{0}', space=sflag, size = 0x4, scoped, tag = 'scoped memory for tpu_custom_call.1']
    #allocation7 [shape = 'u8[8192]{0}', space=vmem, size = 0x2000, scoped, tag = 'input window, operand 1, single buffered']
    #allocation8 [shape = 's32[1]{0}', space=sflag, size = 0x4, scoped, tag = 'scoped memory for tpu_custom_call.1']
    #allocation9 [shape = 'u8[8192]{0}', space=vmem, size = 0x2000, scoped, tag = 'input window, operand 2, single buffered']
    #allocation10 [shape = 'u8[512]{0}', space=vmem, size = 0x400, scoped, tag = 'input window, operand 3, single buffered']
    #allocation11 [shape = 's32[1]{0}', space=sflag, size = 0x4, scoped, tag = 'scoped memory for tpu_custom_call.1']
    #allocation12 [shape = 'u8[512]{0}', space=vmem, size = 0x400, scoped, tag = 'input window, operand 4, single buffered']
    #allocation13 [shape = 'u8[512]{0}', space=vmem, size = 0x400, scoped, tag = 'input window, operand 5, single buffered']
    #allocation14 [shape = 's32[1]{0}', space=sflag, size = 0x4, scoped, tag = 'scoped memory for tpu_custom_call.1']
    #allocation15 [shape = 'u8[512]{0}', space=vmem, size = 0x400, scoped, tag = 'input window, operand 6, single buffered']
    #allocation16 [shape = 'u8[512]{0}', space=vmem, size = 0x400, scoped, tag = 'input window, operand 7, single buffered']
    #allocation17 [shape = 's32[1]{0}', space=sflag, size = 0x4, scoped, tag = 'scoped memory for tpu_custom_call.1']
    #allocation18 [shape = 'u8[8192]{0}', space=vmem, size = 0x2000, scoped, tag = 'input window, operand 8, single buffered']
    #allocation19 [shape = 'u8[512]{0}', space=vmem, size = 0x400, scoped, tag = 'input window, operand 9, single buffered']
    #allocation20 [shape = 's32[1]{0}', space=sflag, size = 0x4, scoped, tag = 'scoped memory for tpu_custom_call.1']
    #allocation21 [shape = 'u8[32768]{0}', space=vmem, size = 0x8000, scoped, tag = 'input window, operand 10, single buffered']
    #allocation22 [shape = 'u8[512]{0}', space=vmem, size = 0x400, scoped, tag = 'input window, operand 11, single buffered']
    #allocation23 [shape = 's32[1]{0}', space=sflag, size = 0x4, scoped, tag = 'scoped memory for tpu_custom_call.1']
    #allocation24 [shape = 'u8[8192]{0}', space=vmem, size = 0x2000, scoped, tag = 'output window, operand 0, single buffered']
    #allocation25 [shape = 'u8[32768]{0}', space=vmem, size = 0x8000, scoped, tag = 'output window, operand 1, single buffered']
    #allocation26 [shape = 's32[1]{0}', space=sflag, size = 0x4, scoped, tag = 'scoped memory for tpu_custom_call.1']
    %19 = vsyncpa [#allocation5], 0
    %20 = vsyncpa [#allocation8], 0
    %21 = vsyncpa [#allocation11], 0
    %22 = vsyncpa [#allocation14], 0
    %23 = vsyncpa [#allocation17], 0
    %24 = vsyncpa [#allocation20], 0
    %25 = vsyncpa [#allocation23], 0
    %26 = vsyncpa [#allocation6], 0
    %27 = vsyncpa [#allocation26], 0
    // Predicated region
    $region2: #{tpu_custom_call.1} parent=1 // pred_check
      _
    $region3: #{tpu_custom_call.1} parent=1 // pred_check_branch
      %29 = sbr.rel (0) target = $region5
    $region4: #{tpu_custom_call.1} parent=1 // pred_region
      %s31 = ssub.s32 256, 256
      %32 = vsyncadd [#allocation5], %s31
      %s33 = sshll.u32 [#allocation4], 4
      %s34 = int_to_ptr.vmem [resolvable:$true] %s33
      %39 = dma.hbm_to_vmem [thread:$0]  %s0, 256, %s34, [#allocation5], 128, 128, 8
    $region5: #{tpu_custom_call.1} parent=1 // pred_fallthru
      _
    // Predicated region
    $region6: #{tpu_custom_call.1} parent=1 // pred_check
      _
    $region7: #{tpu_custom_call.1} parent=1 // pred_check_branch
      %41 = sbr.rel (0) target = $region9
    $region8: #{tpu_custom_call.1} parent=1 // pred_region
      %s43 = ssub.s32 256, 256
      %44 = vsyncadd [#allocation8], %s43
      %s45 = sshll.u32 [#allocation7], 4
      %s46 = int_to_ptr.vmem [resolvable:$true] %s45
      %51 = dma.hbm_to_vmem [thread:$0]  %s1, 256, %s46, [#allocation8], 64, 64, 4
    $region9: #{tpu_custom_call.1} parent=1 // pred_fallthru
      _
    // Predicated region
    $region10: #{tpu_custom_call.1} parent=1 // pred_check
      _
    $region11: #{tpu_custom_call.1} parent=1 // pred_check_branch
      %53 = sbr.rel (0) target = $region13
    $region12: #{tpu_custom_call.1} parent=1 // pred_region
      %s55 = ssub.s32 256, 256
      %56 = vsyncadd [#allocation8], %s55
      %s57 = sshll.u32 [#allocation9], 4
      %s58 = int_to_ptr.vmem [resolvable:$true] %s57
      %63 = dma.hbm_to_vmem [thread:$0]  %s2, 256, %s58, [#allocation8], 64, 64, 4
    $region13: #{tpu_custom_call.1} parent=1 // pred_fallthru
      _
    // Predicated region
    $region14: #{tpu_custom_call.1} parent=1 // pred_check
      _
    $region15: #{tpu_custom_call.1} parent=1 // pred_check_branch
      %65 = sbr.rel (0) target = $region17
    $region16: #{tpu_custom_call.1} parent=1 // pred_region
      %s67 = ssub.s32 16, 16
      %68 = vsyncadd [#allocation11], %s67
      %s70 = sshll.u32 [#allocation10], 4
      %s71 = int_to_ptr.vmem [resolvable:$true] %s70
      %73 = dma.hbm_to_vmem [thread:$0]  %s3, 16, %s71, [#allocation11]
    $region17: #{tpu_custom_call.1} parent=1 // pred_fallthru
      _
    // Predicated region
    $region18: #{tpu_custom_call.1} parent=1 // pred_check
      _
    $region19: #{tpu_custom_call.1} parent=1 // pred_check_branch
      %75 = sbr.rel (0) target = $region21
    $region20: #{tpu_custom_call.1} parent=1 // pred_region
      %s77 = ssub.s32 16, 16
      %78 = vsyncadd [#allocation11], %s77
      %s80 = sshll.u32 [#allocation12], 4
      %s81 = int_to_ptr.vmem [resolvable:$true] %s80
      %83 = dma.hbm_to_vmem [thread:$0]  %s4, 16, %s81, [#allocation11]
    $region21: #{tpu_custom_call.1} parent=1 // pred_fallthru
      _
    // Predicated region
    $region22: #{tpu_custom_call.1} parent=1 // pred_check
      _
    $region23: #{tpu_custom_call.1} parent=1 // pred_check_branch
      %85 = sbr.rel (0) target = $region25
    $region24: #{tpu_custom_call.1} parent=1 // pred_region
      %s87 = ssub.s32 16, 16
      %88 = vsyncadd [#allocation14], %s87
      %s90 = sshll.u32 [#allocation13], 4
      %s91 = int_to_ptr.vmem [resolvable:$true] %s90
      %93 = dma.hbm_to_vmem [thread:$0]  %s5, 16, %s91, [#allocation14]
    $region25: #{tpu_custom_call.1} parent=1 // pred_fallthru
      _
    // Predicated region
    $region26: #{tpu_custom_call.1} parent=1 // pred_check
      _
    $region27: #{tpu_custom_call.1} parent=1 // pred_check_branch
      %95 = sbr.rel (0) target = $region29
    $region28: #{tpu_custom_call.1} parent=1 // pred_region
      %s97 = ssub.s32 16, 16
      %98 = vsyncadd [#allocation14], %s97
      %s100 = sshll.u32 [#allocation15], 4
      %s101 = int_to_ptr.vmem [resolvable:$true] %s100
      %103 = dma.hbm_to_vmem [thread:$0]  %s6, 16, %s101, [#allocation14]
    $region29: #{tpu_custom_call.1} parent=1 // pred_fallthru
      _
    // Predicated region
    $region30: #{tpu_custom_call.1} parent=1 // pred_check
      _
    $region31: #{tpu_custom_call.1} parent=1 // pred_check_branch
      %105 = sbr.rel (0) target = $region33
    $region32: #{tpu_custom_call.1} parent=1 // pred_region
      %s107 = ssub.s32 16, 16
      %108 = vsyncadd [#allocation17], %s107
      %s110 = sshll.u32 [#allocation16], 4
      %s111 = int_to_ptr.vmem [resolvable:$true] %s110
      %113 = dma.hbm_to_vmem [thread:$0]  %s7, 16, %s111, [#allocation17]
    $region33: #{tpu_custom_call.1} parent=1 // pred_fallthru
      _
    // Predicated region
    $region34: #{tpu_custom_call.1} parent=1 // pred_check
      _
    $region35: #{tpu_custom_call.1} parent=1 // pred_check_branch
      %115 = sbr.rel (0) target = $region37
    $region36: #{tpu_custom_call.1} parent=1 // pred_region
      %s117 = ssub.s32 256, 256
      %118 = vsyncadd [#allocation17], %s117
      %s119 = sshll.u32 [#allocation18], 4
      %s120 = int_to_ptr.vmem [resolvable:$true] %s119
      %125 = dma.hbm_to_vmem [thread:$0]  %s8, 256, %s120, [#allocation17], 64, 64, 4
    $region37: #{tpu_custom_call.1} parent=1 // pred_fallthru
      _
    // Predicated region
    $region38: #{tpu_custom_call.1} parent=1 // pred_check
      _
    $region39: #{tpu_custom_call.1} parent=1 // pred_check_branch
      %127 = sbr.rel (0) target = $region41
    $region40: #{tpu_custom_call.1} parent=1 // pred_region
      %s129 = ssub.s32 16, 16
      %130 = vsyncadd [#allocation20], %s129
      %s132 = sshll.u32 [#allocation19], 4
      %s133 = int_to_ptr.vmem [resolvable:$true] %s132
      %135 = dma.hbm_to_vmem [thread:$0]  %s9, 16, %s133, [#allocation20]
    $region41: #{tpu_custom_call.1} parent=1 // pred_fallthru
      _
    // Predicated region
    $region42: #{tpu_custom_call.1} parent=1 // pred_check
      _
    $region43: #{tpu_custom_call.1} parent=1 // pred_check_branch
      %137 = sbr.rel (0) target = $region45
    $region44: #{tpu_custom_call.1} parent=1 // pred_region
      %s139 = ssub.s32 1024, 1024
      %140 = vsyncadd [#allocation20], %s139
      %s141 = sshll.u32 [#allocation21], 4
      %s142 = int_to_ptr.vmem [resolvable:$true] %s141
      %147 = dma.hbm_to_vmem [thread:$0]  %s10, 1024, %s142, [#allocation20], 64, 64, 4
    $region45: #{tpu_custom_call.1} parent=1 // pred_fallthru
      _
    // Predicated region
    $region46: #{tpu_custom_call.1} parent=1 // pred_check
      _
    $region47: #{tpu_custom_call.1} parent=1 // pred_check_branch
      %149 = sbr.rel (0) target = $region49
    $region48: #{tpu_custom_call.1} parent=1 // pred_region
      %s151 = ssub.s32 16, 16
      %152 = vsyncadd [#allocation23], %s151
      %s154 = sshll.u32 [#allocation22], 4
      %s155 = int_to_ptr.vmem [resolvable:$true] %s154
      %157 = dma.hbm_to_vmem [thread:$0]  %s11, 16, %s155, [#allocation23]
    $region49: #{tpu_custom_call.1} parent=1 // pred_fallthru
      _
    // Predicated region
    $region50: #{tpu_custom_call.1} parent=1 // pred_check
      _
    $region51: #{tpu_custom_call.1} parent=1 // pred_check_branch
      %159 = sbr.rel (0) target = $region53
    $region52: #{tpu_custom_call.1} parent=1 // pred_region
      %160 = dma.done [#allocation5], 256
    $region53: #{tpu_custom_call.1} parent=1 // pred_fallthru
      _
    // Predicated region
    $region54: #{tpu_custom_call.1} parent=1 // pred_check
      _
    $region55: #{tpu_custom_call.1} parent=1 // pred_check_branch
      %162 = sbr.rel (0) target = $region57
    $region56: #{tpu_custom_call.1} parent=1 // pred_region
      %163 = dma.done [#allocation8], 256
    $region57: #{tpu_custom_call.1} parent=1 // pred_fallthru
      _
    // Predicated region
    $region58: #{tpu_custom_call.1} parent=1 // pred_check
      _
    $region59: #{tpu_custom_call.1} parent=1 // pred_check_branch
      %165 = sbr.rel (0) target = $region61
    $region60: #{tpu_custom_call.1} parent=1 // pred_region
      %166 = dma.done [#allocation8], 256
    $region61: #{tpu_custom_call.1} parent=1 // pred_fallthru
      _
    // Predicated region
    $region62: #{tpu_custom_call.1} parent=1 // pred_check
      _
    $region63: #{tpu_custom_call.1} parent=1 // pred_check_branch
      %168 = sbr.rel (0) target = $region65
    $region64: #{tpu_custom_call.1} parent=1 // pred_region
      %169 = dma.done [#allocation11], 16
    $region65: #{tpu_custom_call.1} parent=1 // pred_fallthru
      _
    // Predicated region
    $region66: #{tpu_custom_call.1} parent=1 // pred_check
      _
    $region67: #{tpu_custom_call.1} parent=1 // pred_check_branch
      %171 = sbr.rel (0) target = $region69
    $region68: #{tpu_custom_call.1} parent=1 // pred_region
      %172 = dma.done [#allocation11], 16
    $region69: #{tpu_custom_call.1} parent=1 // pred_fallthru
      _
    // Predicated region
    $region70: #{tpu_custom_call.1} parent=1 // pred_check
      _
    $region71: #{tpu_custom_call.1} parent=1 // pred_check_branch
      %174 = sbr.rel (0) target = $region73
    $region72: #{tpu_custom_call.1} parent=1 // pred_region
      %175 = dma.done [#allocation14], 16
    $region73: #{tpu_custom_call.1} parent=1 // pred_fallthru
      _
    // Predicated region
    $region74: #{tpu_custom_call.1} parent=1 // pred_check
      _
    $region75: #{tpu_custom_call.1} parent=1 // pred_check_branch
      %177 = sbr.rel (0) target = $region77
    $region76: #{tpu_custom_call.1} parent=1 // pred_region
      %178 = dma.done [#allocation14], 16
    $region77: #{tpu_custom_call.1} parent=1 // pred_fallthru
      _
    // Predicated region
    $region78: #{tpu_custom_call.1} parent=1 // pred_check
      _
    $region79: #{tpu_custom_call.1} parent=1 // pred_check_branch
      %180 = sbr.rel (0) target = $region81
    $region80: #{tpu_custom_call.1} parent=1 // pred_region
      %181 = dma.done [#allocation17], 16
    $region81: #{tpu_custom_call.1} parent=1 // pred_fallthru
      _
    // Predicated region
    $region82: #{tpu_custom_call.1} parent=1 // pred_check
      _
    $region83: #{tpu_custom_call.1} parent=1 // pred_check_branch
      %183 = sbr.rel (0) target = $region85
    $region84: #{tpu_custom_call.1} parent=1 // pred_region
      %184 = dma.done [#allocation17], 256
    $region85: #{tpu_custom_call.1} parent=1 // pred_fallthru
      _
    // Predicated region
    $region86: #{tpu_custom_call.1} parent=1 // pred_check
      _
    $region87: #{tpu_custom_call.1} parent=1 // pred_check_branch
      %186 = sbr.rel (0) target = $region89
    $region88: #{tpu_custom_call.1} parent=1 // pred_region
      %187 = dma.done [#allocation20], 16
    $region89: #{tpu_custom_call.1} parent=1 // pred_fallthru
      _
    // Predicated region
    $region90: #{tpu_custom_call.1} parent=1 // pred_check
      _
    $region91: #{tpu_custom_call.1} parent=1 // pred_check_branch
      %189 = sbr.rel (0) target = $region93
    $region92: #{tpu_custom_call.1} parent=1 // pred_region
      %190 = dma.done [#allocation20], 1024
    $region93: #{tpu_custom_call.1} parent=1 // pred_fallthru
      _
    // Predicated region
    $region94: #{tpu_custom_call.1} parent=1 // pred_check
      _
    $region95: #{tpu_custom_call.1} parent=1 // pred_check_branch
      %192 = sbr.rel (0) target = $region97
    $region96: #{tpu_custom_call.1} parent=1 // pred_region
      %193 = dma.done [#allocation23], 16
    $region97: #{tpu_custom_call.1} parent=1 // pred_fallthru
      _
    %v195 = vld [vmem:[#allocation4] sm:$0xff]
    %v196 = vld [vmem:[#allocation4 + $0x8] sm:$0xff]
    %v197 = vld [vmem:[#allocation12] sm:$0x1]
    %v198 = vld [vmem:[#allocation13] sm:$0x1]
    %vm199 = vcmask 261120
    %v200 = vsel %vm199, %v195, 0.0
    %201 = vadd.xlane.f32.xlu0 %v200
    %v202 = vpop.xlane.xlu0 %201
    %v203 = vsel %vm199, %v196, 0.0
    %204 = vadd.xlane.f32.xlu0 %v203
    %v205 = vpop.xlane.xlu0 %204
    %v206 = vrcp.pop 32.0
    %v207 = vmul.f32 %v202, %v206
    %v208 = vmul.f32 %v205, %v206
    %v209 = vsub.f32 %v195, %v207
    %v210 = vsub.f32 %v196, %v208
    %v211 = vmul.f32 %v209, %v209
    %v212 = vmul.f32 %v210, %v210
    %v213 = vsel %vm199, %v211, 0.0
    %214 = vadd.xlane.f32.xlu0 %v213
    %v215 = vpop.xlane.xlu0 %214
    %v216 = vsel %vm199, %v212, 0.0
    %217 = vadd.xlane.f32.xlu0 %v216
    %v218 = vpop.xlane.xlu0 %217
    %v219 = vmul.f32 %v215, %v206
    %v220 = vmul.f32 %v218, %v206
    %v221 = vadd.f32 %v219, 1e-05
    %v222 = vadd.f32 %v220, 1e-05
    %v223 = vrsqrt.pop %v221
    %v224 = vrsqrt.pop %v222
    %v225 = vmul.f32 %v209, %v223
    %v226 = vmul.f32 %v210, %v224
    %v228 = vlaneseq
    %v229 = vshrl.u32 %v228, 7
    %v230 = vsub.s32 0, %v229
    %v231 = vrot.slane %v197, %v230
    %v233 = vmul.f32 %v225, %v231
    %v234 = vmul.f32 %v226, %v231
    %v236 = vlaneseq
    %v237 = vshrl.u32 %v236, 7
    %v238 = vsub.s32 0, %v237
    %v239 = vrot.slane %v198, %v238
    %v241 = vadd.f32 %v233, %v239
    %v242 = vadd.f32 %v234, %v239
    %v243 = vpack.c.bf16 %v242, %v241
    %v244 = vld [vmem:[#allocation7] sm:$0xf]
    %v245 = vld [vmem:[#allocation7 + $0x4] sm:$0xf]
    %v246 = vld [vmem:[#allocation7 + $0x8] sm:$0xf]
    %v247 = vld [vmem:[#allocation7 + $0xc] sm:$0xf]
    %v252 = vunpack.c.l.b16 %v244
    %v253 = vunpack.c.l.b16 %v245
    %v254 = vunpack.c.l.b16 %v246
    %v255 = vunpack.c.l.b16 %v247
    %v256 = vpack.c.b16 %v253, %v252
    %v257 = vpack.c.b16 %v255, %v254
    %v261 = vsel %vm199, %v243, 0
    %263 = vmatprep.subr.bf16.mxu0 0
    %264 = vmatpush1.bf16.msra.mxu0 %v256
    %265 = vmatprep.subr.bf16.mxu0 0
    %266 = vmatpush1.bf16.msra.mxu0 %v257
    %267 = vmatprep.subr.bf16.mxu0 0
    %268 = vmatpush1.bf16.msra.mxu0 0
    %269 = vmatprep.subr.bf16.mxu0 0
    %270 = vmatpush1.bf16.msra.mxu0 0
    %271 = vmatprep.subr.bf16.mxu0 0
    %272 = vmatpush1.bf16.msra.mxu0 0
    %273 = vmatprep.subr.bf16.mxu0 0
    %274 = vmatpush1.bf16.msra.mxu0 0
    %275 = vmatprep.subr.bf16.mxu0 0
    %276 = vmatpush1.bf16.msra.mxu0 0
    %277 = vmatprep.subr.bf16.mxu0 0
    %278 = vmatpush1.bf16.msra.mxu0 0
    %279 = vmatprep.subr.bf16.mxu0 0
    %280 = vmatpush1.bf16.msra.mxu0 0
    %281 = vmatprep.subr.bf16.mxu0 0
    %282 = vmatpush1.bf16.msra.mxu0 0
    %283 = vmatprep.subr.bf16.mxu0 0
    %284 = vmatpush1.bf16.msra.mxu0 0
    %285 = vmatprep.subr.bf16.mxu0 0
    %286 = vmatpush1.bf16.msra.mxu0 0
    %287 = vmatprep.subr.bf16.mxu0 0
    %288 = vmatpush1.bf16.msra.mxu0 0
    %289 = vmatprep.subr.bf16.mxu0 0
    %290 = vmatpush1.bf16.msra.mxu0 0
    %291 = vmatprep.subr.bf16.mxu0 0
    %292 = vmatpush1.bf16.msra.mxu0 0
    %293 = vmatprep.subr.bf16.mxu0 0
    %294 = vmatpush1.bf16.msra.mxu0 0
    %295 = vmatprep.mubr.bf16.mxu0 0
    %296 = vmatmul.mubr.bf16.gmra.mrb[0].mxu0 %v261
    %v297 = vpop.f32.mrb[0].mxu0
    %v298 = vadd.f32 0.0, %v297
    %v299 = vpop.f32.mrb[0].mxu0
    %v300 = vpop.f32.mrb[0].mxu0
    %v301 = vadd.f32 0.0, %v300
    %v302 = vpop.f32.mrb[0].mxu0
    %303 = vdwg.mxu0
    %v304 = vpack.c.bf16 %v301, %v298
    %vm305 = vcmask 785408
    %306 = vst.msk [vmem:[#allocation2] sm:$0xff] %vm305, %v304
    %v307 = vld [vmem:[#allocation2] sm:$0xff]
    %v309 = vunpack.c.l.b16 %v307
    %v310 = vunpack.c.h.b16 %v307
    %v311 = vpack.c.b16 %v309, %v309
    %v312 = vpack.c.b16 %v310, %v310
    %313 = vrot.lane.b32.xlu0 %v311, 96
    %v314 = vpop.permute.xlu0 %313
    %vm315 = vcmask 64512
    %v317 = vsel %vm315, %v311, 0
    %v320 = vsel %vm315, %v314, 0
    %322 = vmatprep.subr.bf16.mxu0 0
    %323 = vmatpush1.bf16.xpose.msra.mxu0 %v320
    %324 = vmatprep.subr.bf16.mxu0 0
    %325 = vmatpush1.bf16.xpose.msra.mxu0 0
    %326 = vmatprep.subr.bf16.mxu0 0
    %327 = vmatpush1.bf16.xpose.msra.mxu0 0
    %328 = vmatprep.subr.bf16.mxu0 0
    %329 = vmatpush1.bf16.xpose.msra.mxu0 0
    %330 = vmatprep.subr.bf16.mxu0 0
    %331 = vmatpush1.bf16.xpose.msra.mxu0 0
    %332 = vmatprep.subr.bf16.mxu0 0
    %333 = vmatpush1.bf16.xpose.msra.mxu0 0
    %334 = vmatprep.subr.bf16.mxu0 0
    %335 = vmatpush1.bf16.xpose.msra.mxu0 0
    %336 = vmatprep.subr.bf16.mxu0 0
    %337 = vmatpush1.bf16.xpose.msra.mxu0 0
    %338 = vmatprep.subr.bf16.mxu0 0
    %339 = vmatpush1.bf16.xpose.msra.mxu0 0
    %340 = vmatprep.subr.bf16.mxu0 0
    %341 = vmatpush1.bf16.xpose.msra.mxu0 0
    %342 = vmatprep.subr.bf16.mxu0 0
    %343 = vmatpush1.bf16.xpose.msra.mxu0 0
    %344 = vmatprep.subr.bf16.mxu0 0
    %345 = vmatpush1.bf16.xpose.msra.mxu0 0
    %346 = vmatprep.subr.bf16.mxu0 0
    %347 = vmatpush1.bf16.xpose.msra.mxu0 0
    %348 = vmatprep.subr.bf16.mxu0 0
    %349 = vmatpush1.bf16.xpose.msra.mxu0 0
    %350 = vmatprep.subr.bf16.mxu0 0
    %351 = vmatpush1.bf16.xpose.msra.mxu0 0
    %352 = vmatprep.subr.bf16.mxu0 0
    %353 = vmatpush1.bf16.xpose.msra.mxu0 0
    %354 = vmatprep.mubr.bf16.mxu0 0
    %355 = vmatmul.mubr.bf16.gmra.mrb[0].mxu0 %v317
    %v356 = vpop.f32.mrb[0].mxu0
    %v357 = vadd.f32 0.0, %v356
    %v358 = vpop.f32.mrb[0].mxu0
    %v359 = vpop.f32.mrb[0].mxu0
    %v360 = vpop.f32.mrb[0].mxu0
    %361 = vdwg.mxu0
    %362 = vrot.lane.b32.xlu0 %v312, 96
    %v363 = vpop.permute.xlu0 %362
    %v365 = vsel %vm315, %v312, 0
    %v368 = vsel %vm315, %v363, 0
    %370 = vmatprep.subr.bf16.mxu0 0
    %371 = vmatpush1.bf16.xpose.msra.mxu0 %v368
    %372 = vmatprep.subr.bf16.mxu0 0
    %373 = vmatpush1.bf16.xpose.msra.mxu0 0
    %374 = vmatprep.subr.bf16.mxu0 0
    %375 = vmatpush1.bf16.xpose.msra.mxu0 0
    %376 = vmatprep.subr.bf16.mxu0 0
    %377 = vmatpush1.bf16.xpose.msra.mxu0 0
    %378 = vmatprep.subr.bf16.mxu0 0
    %379 = vmatpush1.bf16.xpose.msra.mxu0 0
    %380 = vmatprep.subr.bf16.mxu0 0
    %381 = vmatpush1.bf16.xpose.msra.mxu0 0
    %382 = vmatprep.subr.bf16.mxu0 0
    %383 = vmatpush1.bf16.xpose.msra.mxu0 0
    %384 = vmatprep.subr.bf16.mxu0 0
    %385 = vmatpush1.bf16.xpose.msra.mxu0 0
    %386 = vmatprep.subr.bf16.mxu0 0
    %387 = vmatpush1.bf16.xpose.msra.mxu0 0
    %388 = vmatprep.subr.bf16.mxu0 0
    %389 = vmatpush1.bf16.xpose.msra.mxu0 0
    %390 = vmatprep.subr.bf16.mxu0 0
    %391 = vmatpush1.bf16.xpose.msra.mxu0 0
    %392 = vmatprep.subr.bf16.mxu0 0
    %393 = vmatpush1.bf16.xpose.msra.mxu0 0
    %394 = vmatprep.subr.bf16.mxu0 0
    %395 = vmatpush1.bf16.xpose.msra.mxu0 0
    %396 = vmatprep.subr.bf16.mxu0 0
    %397 = vmatpush1.bf16.xpose.msra.mxu0 0
    %398 = vmatprep.subr.bf16.mxu0 0
    %399 = vmatpush1.bf16.xpose.msra.mxu0 0
    %400 = vmatprep.subr.bf16.mxu0 0
    %401 = vmatpush1.bf16.xpose.msra.mxu0 0
    %402 = vmatprep.mubr.bf16.mxu0 0
    %403 = vmatmul.mubr.bf16.gmra.mrb[0].mxu0 %v365
    %v404 = vpop.f32.mrb[0].mxu0
    %v405 = vadd.f32 0.0, %v404
    %v406 = vpop.f32.mrb[0].mxu0
    %v407 = vpop.f32.mrb[0].mxu0
    %v408 = vpop.f32.mrb[0].mxu0
    %409 = vdwg.mxu0
    %v410 = vsel %vm315, %v357, -inf
    %411 = vmax.xlane.f32.xlu0 %v410
    %v412 = vpop.xlane.xlu0 %411
    %v413 = vsel %vm315, %v405, -inf
    %414 = vmax.xlane.f32.xlu0 %v413
    %v415 = vpop.xlane.xlu0 %414
    %v416 = vsub.f32 %v357, %v412
    %v417 = vsub.f32 %v405, %v415
    %v418 = vmul.f32 %v416, 1.442695
    %v419 = vpow.pop %v418
    %v420 = vmul.f32 %v417, 1.442695
    %v421 = vpow.pop %v420
    %v422 = vsel %vm315, %v419, 0.0
    %423 = vadd.xlane.f32.xlu0 %v422
    %v424 = vpop.xlane.xlu0 %423
    %v425 = vsel %vm315, %v421, 0.0
    %426 = vadd.xlane.f32.xlu0 %v425
    %v427 = vpop.xlane.xlu0 %426
    %v428 = vrcp.pop %v424
    %v429 = vrcp.pop %v427
    %v430 = vmul.f32 %v419, %v428
    %v431 = vmul.f32 %v421, %v429
    %432 = vst.msk [vmem:[#allocation25] sm:$0xff] %vm315, %v430
    %433 = vst.msk [vmem:[#allocation25 + $0x20] sm:$0xff] %vm315, %v431
    %v434 = vpack.c.bf16 %v430, %v430
    %v435 = vpack.c.bf16 %v431, %v431
    %436 = vrot.lane.b32.xlu0 %v311, 64
    %v437 = vpop.permute.xlu0 %436
    %v439 = vsel %vm315, %v434, 0
    %vm441 = vcmask 1043456
    %v443 = vsel %vm441, %v437, 0
    %445 = vmatprep.subr.bf16.mxu0 0
    %446 = vmatpush1.bf16.msra.mxu0 %v443
    %447 = vmatprep.subr.bf16.mxu0 0
    %448 = vmatpush1.bf16.msra.mxu0 0
    %449 = vmatprep.subr.bf16.mxu0 0
    %450 = vmatpush1.bf16.msra.mxu0 0
    %451 = vmatprep.subr.bf16.mxu0 0
    %452 = vmatpush1.bf16.msra.mxu0 0
    %453 = vmatprep.subr.bf16.mxu0 0
    %454 = vmatpush1.bf16.msra.mxu0 0
    %455 = vmatprep.subr.bf16.mxu0 0
    %456 = vmatpush1.bf16.msra.mxu0 0
    %457 = vmatprep.subr.bf16.mxu0 0
    %458 = vmatpush1.bf16.msra.mxu0 0
    %459 = vmatprep.subr.bf16.mxu0 0
    %460 = vmatpush1.bf16.msra.mxu0 0
    %461 = vmatprep.subr.bf16.mxu0 0
    %462 = vmatpush1.bf16.msra.mxu0 0
    %463 = vmatprep.subr.bf16.mxu0 0
    %464 = vmatpush1.bf16.msra.mxu0 0
    %465 = vmatprep.subr.bf16.mxu0 0
    %466 = vmatpush1.bf16.msra.mxu0 0
    %467 = vmatprep.subr.bf16.mxu0 0
    %468 = vmatpush1.bf16.msra.mxu0 0
    %469 = vmatprep.subr.bf16.mxu0 0
    %470 = vmatpush1.bf16.msra.mxu0 0
    %471 = vmatprep.subr.bf16.mxu0 0
    %472 = vmatpush1.bf16.msra.mxu0 0
    %473 = vmatprep.subr.bf16.mxu0 0
    %474 = vmatpush1.bf16.msra.mxu0 0
    %475 = vmatprep.subr.bf16.mxu0 0
    %476 = vmatpush1.bf16.msra.mxu0 0
    %477 = vmatprep.mubr.bf16.mxu0 0
    %478 = vmatmul.mubr.bf16.gmra.mrb[0].mxu0 %v439
    %v479 = vpop.f32.mrb[0].mxu0
    %v480 = vadd.f32 0.0, %v479
    %v481 = vpop.f32.mrb[0].mxu0
    %v482 = vpop.f32.mrb[0].mxu0
    %v483 = vpop.f32.mrb[0].mxu0
    %484 = vdwg.mxu0
    %485 = vrot.lane.b32.xlu0 %v312, 64
    %v486 = vpop.permute.xlu0 %485
    %v488 = vsel %vm315, %v435, 0
    %v491 = vsel %vm441, %v486, 0
    %493 = vmatprep.subr.bf16.mxu0 0
    %494 = vmatpush1.bf16.msra.mxu0 %v491
    %495 = vmatprep.subr.bf16.mxu0 0
    %496 = vmatpush1.bf16.msra.mxu0 0
    %497 = vmatprep.subr.bf16.mxu0 0
    %498 = vmatpush1.bf16.msra.mxu0 0
    %499 = vmatprep.subr.bf16.mxu0 0
    %500 = vmatpush1.bf16.msra.mxu0 0
    %501 = vmatprep.subr.bf16.mxu0 0
    %502 = vmatpush1.bf16.msra.mxu0 0
    %503 = vmatprep.subr.bf16.mxu0 0
    %504 = vmatpush1.bf16.msra.mxu0 0
    %505 = vmatprep.subr.bf16.mxu0 0
    %506 = vmatpush1.bf16.msra.mxu0 0
    %507 = vmatprep.subr.bf16.mxu0 0
    %508 = vmatpush1.bf16.msra.mxu0 0
    %509 = vmatprep.subr.bf16.mxu0 0
    %510 = vmatpush1.bf16.msra.mxu0 0
    %511 = vmatprep.subr.bf16.mxu0 0
    %512 = vmatpush1.bf16.msra.mxu0 0
    %513 = vmatprep.subr.bf16.mxu0 0
    %514 = vmatpush1.bf16.msra.mxu0 0
    %515 = vmatprep.subr.bf16.mxu0 0
    %516 = vmatpush1.bf16.msra.mxu0 0
    %517 = vmatprep.subr.bf16.mxu0 0
    %518 = vmatpush1.bf16.msra.mxu0 0
    %519 = vmatprep.subr.bf16.mxu0 0
    %520 = vmatpush1.bf16.msra.mxu0 0
    %521 = vmatprep.subr.bf16.mxu0 0
    %522 = vmatpush1.bf16.msra.mxu0 0
    %523 = vmatprep.subr.bf16.mxu0 0
    %524 = vmatpush1.bf16.msra.mxu0 0
    %525 = vmatprep.mubr.bf16.mxu0 0
    %526 = vmatmul.mubr.bf16.gmra.mrb[0].mxu0 %v488
    %v527 = vpop.f32.mrb[0].mxu0
    %v528 = vadd.f32 0.0, %v527
    %v529 = vpop.f32.mrb[0].mxu0
    %v530 = vpop.f32.mrb[0].mxu0
    %v531 = vpop.f32.mrb[0].mxu0
    %532 = vdwg.mxu0
    %v533 = vpack.c.bf16 %v528, %v480
    %534 = vst.msk [vmem:[#allocation3] sm:$0xff] %vm315, %v533
    %v535 = vld [vmem:[#allocation2] sm:$0xff]
    %v537 = vunpack.c.l.b16 %v535
    %v538 = vunpack.c.h.b16 %v535
    %v539 = vpack.c.b16 %v537, %v537
    %540 = vrot.lane.b32.xlu0 %v539, 120
    %v541 = vpop.permute.xlu0 %540
    %542 = vrot.lane.b32.xlu0 %v539, 88
    %v543 = vpop.permute.xlu0 %542
    %v545 = vsel %vm315, %v541, 0
    %v548 = vsel %vm315, %v543, 0
    %550 = vmatprep.subr.bf16.mxu0 0
    %551 = vmatpush1.bf16.xpose.msra.mxu0 %v548
    %552 = vmatprep.subr.bf16.mxu0 0
    %553 = vmatpush1.bf16.xpose.msra.mxu0 0
    %554 = vmatprep.subr.bf16.mxu0 0
    %555 = vmatpush1.bf16.xpose.msra.mxu0 0
    %556 = vmatprep.subr.bf16.mxu0 0
    %557 = vmatpush1.bf16.xpose.msra.mxu0 0
    %558 = vmatprep.subr.bf16.mxu0 0
    %559 = vmatpush1.bf16.xpose.msra.mxu0 0
    %560 = vmatprep.subr.bf16.mxu0 0
    %561 = vmatpush1.bf16.xpose.msra.mxu0 0
    %562 = vmatprep.subr.bf16.mxu0 0
    %563 = vmatpush1.bf16.xpose.msra.mxu0 0
    %564 = vmatprep.subr.bf16.mxu0 0
    %565 = vmatpush1.bf16.xpose.msra.mxu0 0
    %566 = vmatprep.subr.bf16.mxu0 0
    %567 = vmatpush1.bf16.xpose.msra.mxu0 0
    %568 = vmatprep.subr.bf16.mxu0 0
    %569 = vmatpush1.bf16.xpose.msra.mxu0 0
    %570 = vmatprep.subr.bf16.mxu0 0
    %571 = vmatpush1.bf16.xpose.msra.mxu0 0
    %572 = vmatprep.subr.bf16.mxu0 0
    %573 = vmatpush1.bf16.xpose.msra.mxu0 0
    %574 = vmatprep.subr.bf16.mxu0 0
    %575 = vmatpush1.bf16.xpose.msra.mxu0 0
    %576 = vmatprep.subr.bf16.mxu0 0
    %577 = vmatpush1.bf16.xpose.msra.mxu0 0
    %578 = vmatprep.subr.bf16.mxu0 0
    %579 = vmatpush1.bf16.xpose.msra.mxu0 0
    %580 = vmatprep.subr.bf16.mxu0 0
    %581 = vmatpush1.bf16.xpose.msra.mxu0 0
    %582 = vmatprep.mubr.bf16.mxu0 0
    %583 = vmatmul.mubr.bf16.gmra.mrb[0].mxu0 %v545
    %v584 = vpop.f32.mrb[0].mxu0
    %v585 = vadd.f32 0.0, %v584
    %v586 = vpop.f32.mrb[0].mxu0
    %v587 = vpop.f32.mrb[0].mxu0
    %v588 = vpop.f32.mrb[0].mxu0
    %589 = vdwg.mxu0
    %v590 = vpack.c.b16 %v538, %v538
    %591 = vrot.lane.b32.xlu0 %v590, 120
    %v592 = vpop.permute.xlu0 %591
    %593 = vrot.lane.b32.xlu0 %v590, 88
    %v594 = vpop.permute.xlu0 %593
    %v596 = vsel %vm315, %v592, 0
    %v599 = vsel %vm315, %v594, 0
    %601 = vmatprep.subr.bf16.mxu0 0
    %602 = vmatpush1.bf16.xpose.msra.mxu0 %v599
    %603 = vmatprep.subr.bf16.mxu0 0
    %604 = vmatpush1.bf16.xpose.msra.mxu0 0
    %605 = vmatprep.subr.bf16.mxu0 0
    %606 = vmatpush1.bf16.xpose.msra.mxu0 0
    %607 = vmatprep.subr.bf16.mxu0 0
    %608 = vmatpush1.bf16.xpose.msra.mxu0 0
    %609 = vmatprep.subr.bf16.mxu0 0
    %610 = vmatpush1.bf16.xpose.msra.mxu0 0
    %611 = vmatprep.subr.bf16.mxu0 0
    %612 = vmatpush1.bf16.xpose.msra.mxu0 0
    %613 = vmatprep.subr.bf16.mxu0 0
    %614 = vmatpush1.bf16.xpose.msra.mxu0 0
    %615 = vmatprep.subr.bf16.mxu0 0
    %616 = vmatpush1.bf16.xpose.msra.mxu0 0
    %617 = vmatprep.subr.bf16.mxu0 0
    %618 = vmatpush1.bf16.xpose.msra.mxu0 0
    %619 = vmatprep.subr.bf16.mxu0 0
    %620 = vmatpush1.bf16.xpose.msra.mxu0 0
    %621 = vmatprep.subr.bf16.mxu0 0
    %622 = vmatpush1.bf16.xpose.msra.mxu0 0
    %623 = vmatprep.subr.bf16.mxu0 0
    %624 = vmatpush1.bf16.xpose.msra.mxu0 0
    %625 = vmatprep.subr.bf16.mxu0 0
    %626 = vmatpush1.bf16.xpose.msra.mxu0 0
    %627 = vmatprep.subr.bf16.mxu0 0
    %628 = vmatpush1.bf16.xpose.msra.mxu0 0
    %629 = vmatprep.subr.bf16.mxu0 0
    %630 = vmatpush1.bf16.xpose.msra.mxu0 0
    %631 = vmatprep.subr.bf16.mxu0 0
    %632 = vmatpush1.bf16.xpose.msra.mxu0 0
    %633 = vmatprep.mubr.bf16.mxu0 0
    %634 = vmatmul.mubr.bf16.gmra.mrb[0].mxu0 %v596
    %v635 = vpop.f32.mrb[0].mxu0
    %v636 = vadd.f32 0.0, %v635
    %v637 = vpop.f32.mrb[0].mxu0
    %v638 = vpop.f32.mrb[0].mxu0
    %v639 = vpop.f32.mrb[0].mxu0
    %640 = vdwg.mxu0
    %v641 = vsel %vm315, %v585, -inf
    %642 = vmax.xlane.f32.xlu0 %v641
    %v643 = vpop.xlane.xlu0 %642
    %v644 = vsel %vm315, %v636, -inf
    %645 = vmax.xlane.f32.xlu0 %v644
    %v646 = vpop.xlane.xlu0 %645
    %v647 = vsub.f32 %v585, %v643
    %v648 = vsub.f32 %v636, %v646
    %v649 = vmul.f32 %v647, 1.442695
    %v650 = vpow.pop %v649
    %v651 = vmul.f32 %v648, 1.442695
    %v652 = vpow.pop %v651
    %v653 = vsel %vm315, %v650, 0.0
    %654 = vadd.xlane.f32.xlu0 %v653
    %v655 = vpop.xlane.xlu0 %654
    %v656 = vsel %vm315, %v652, 0.0
    %657 = vadd.xlane.f32.xlu0 %v656
    %v658 = vpop.xlane.xlu0 %657
    %v659 = vrcp.pop %v655
    %v660 = vrcp.pop %v658
    %v661 = vmul.f32 %v650, %v659
    %v662 = vmul.f32 %v652, %v660
    %s663 = scalar_lea.vmem [#allocation25], 8
    %664 = vst.msk [vmem:[%s663] sm:$0xff] %vm315, %v661
    %665 = vst.msk [vmem:[%s663 + $0x20] sm:$0xff] %vm315, %v662
    %v666 = vpack.c.bf16 %v661, %v661
    %v667 = vpack.c.bf16 %v662, %v662
    %668 = vrot.lane.b32.xlu0 %v539, 56
    %v669 = vpop.permute.xlu0 %668
    %v671 = vsel %vm315, %v666, 0
    %v674 = vsel %vm441, %v669, 0
    %676 = vmatprep.subr.bf16.mxu0 0
    %677 = vmatpush1.bf16.msra.mxu0 %v674
    %678 = vmatprep.subr.bf16.mxu0 0
    %679 = vmatpush1.bf16.msra.mxu0 0
    %680 = vmatprep.subr.bf16.mxu0 0
    %681 = vmatpush1.bf16.msra.mxu0 0
    %682 = vmatprep.subr.bf16.mxu0 0
    %683 = vmatpush1.bf16.msra.mxu0 0
    %684 = vmatprep.subr.bf16.mxu0 0
    %685 = vmatpush1.bf16.msra.mxu0 0
    %686 = vmatprep.subr.bf16.mxu0 0
    %687 = vmatpush1.bf16.msra.mxu0 0
    %688 = vmatprep.subr.bf16.mxu0 0
    %689 = vmatpush1.bf16.msra.mxu0 0
    %690 = vmatprep.subr.bf16.mxu0 0
    %691 = vmatpush1.bf16.msra.mxu0 0
    %692 = vmatprep.subr.bf16.mxu0 0
    %693 = vmatpush1.bf16.msra.mxu0 0
    %694 = vmatprep.subr.bf16.mxu0 0
    %695 = vmatpush1.bf16.msra.mxu0 0
    %696 = vmatprep.subr.bf16.mxu0 0
    %697 = vmatpush1.bf16.msra.mxu0 0
    %698 = vmatprep.subr.bf16.mxu0 0
    %699 = vmatpush1.bf16.msra.mxu0 0
    %700 = vmatprep.subr.bf16.mxu0 0
    %701 = vmatpush1.bf16.msra.mxu0 0
    %702 = vmatprep.subr.bf16.mxu0 0
    %703 = vmatpush1.bf16.msra.mxu0 0
    %704 = vmatprep.subr.bf16.mxu0 0
    %705 = vmatpush1.bf16.msra.mxu0 0
    %706 = vmatprep.subr.bf16.mxu0 0
    %707 = vmatpush1.bf16.msra.mxu0 0
    %708 = vmatprep.mubr.bf16.mxu0 0
    %709 = vmatmul.mubr.bf16.gmra.mrb[0].mxu0 %v671
    %v710 = vpop.f32.mrb[0].mxu0
    %v711 = vadd.f32 0.0, %v710
    %v712 = vpop.f32.mrb[0].mxu0
    %v713 = vpop.f32.mrb[0].mxu0
    %v714 = vpop.f32.mrb[0].mxu0
    %715 = vdwg.mxu0
    %716 = vrot.lane.b32.xlu0 %v590, 56
    %v717 = vpop.permute.xlu0 %716
    %v719 = vsel %vm315, %v667, 0
    %v722 = vsel %vm441, %v717, 0
    %724 = vmatprep.subr.bf16.mxu0 0
    %725 = vmatpush1.bf16.msra.mxu0 %v722
    %726 = vmatprep.subr.bf16.mxu0 0
    %727 = vmatpush1.bf16.msra.mxu0 0
    %728 = vmatprep.subr.bf16.mxu0 0
    %729 = vmatpush1.bf16.msra.mxu0 0
    %730 = vmatprep.subr.bf16.mxu0 0
    %731 = vmatpush1.bf16.msra.mxu0 0
    %732 = vmatprep.subr.bf16.mxu0 0
    %733 = vmatpush1.bf16.msra.mxu0 0
    %734 = vmatprep.subr.bf16.mxu0 0
    %735 = vmatpush1.bf16.msra.mxu0 0
    %736 = vmatprep.subr.bf16.mxu0 0
    %737 = vmatpush1.bf16.msra.mxu0 0
    %738 = vmatprep.subr.bf16.mxu0 0
    %739 = vmatpush1.bf16.msra.mxu0 0
    %740 = vmatprep.subr.bf16.mxu0 0
    %741 = vmatpush1.bf16.msra.mxu0 0
    %742 = vmatprep.subr.bf16.mxu0 0
    %743 = vmatpush1.bf16.msra.mxu0 0
    %744 = vmatprep.subr.bf16.mxu0 0
    %745 = vmatpush1.bf16.msra.mxu0 0
    %746 = vmatprep.subr.bf16.mxu0 0
    %747 = vmatpush1.bf16.msra.mxu0 0
    %748 = vmatprep.subr.bf16.mxu0 0
    %749 = vmatpush1.bf16.msra.mxu0 0
    %750 = vmatprep.subr.bf16.mxu0 0
    %751 = vmatpush1.bf16.msra.mxu0 0
    %752 = vmatprep.subr.bf16.mxu0 0
    %753 = vmatpush1.bf16.msra.mxu0 0
    %754 = vmatprep.subr.bf16.mxu0 0
    %755 = vmatpush1.bf16.msra.mxu0 0
    %756 = vmatprep.mubr.bf16.mxu0 0
    %757 = vmatmul.mubr.bf16.gmra.mrb[0].mxu0 %v719
    %v758 = vpop.f32.mrb[0].mxu0
    %v759 = vadd.f32 0.0, %v758
    %v760 = vpop.f32.mrb[0].mxu0
    %v761 = vpop.f32.mrb[0].mxu0
    %v762 = vpop.f32.mrb[0].mxu0
    %763 = vdwg.mxu0
    %v764 = vpack.c.bf16 %v759, %v711
    %766 = vrot.lane.b32.xlu0 %v764, 8
    %v767 = vpop.permute.xlu0 %766
    %vm769 = vcmask 130112
    %770 = vst.msk [vmem:[#allocation3] sm:$0xff] %vm769, %v767
    %v771 = vld [vmem:[#allocation2] sm:$0xff]
    %v773 = vunpack.c.l.b16 %v771
    %v774 = vunpack.c.h.b16 %v771
    %v775 = vpack.c.b16 %v773, %v773
    %776 = vrot.lane.b32.xlu0 %v775, 112
    %v777 = vpop.permute.xlu0 %776
    %778 = vrot.lane.b32.xlu0 %v775, 80
    %v779 = vpop.permute.xlu0 %778
    %v781 = vsel %vm315, %v777, 0
    %v784 = vsel %vm315, %v779, 0
    %786 = vmatprep.subr.bf16.mxu0 0
    %787 = vmatpush1.bf16.xpose.msra.mxu0 %v784
    %788 = vmatprep.subr.bf16.mxu0 0
    %789 = vmatpush1.bf16.xpose.msra.mxu0 0
    %790 = vmatprep.subr.bf16.mxu0 0
    %791 = vmatpush1.bf16.xpose.msra.mxu0 0
    %792 = vmatprep.subr.bf16.mxu0 0
    %793 = vmatpush1.bf16.xpose.msra.mxu0 0
    %794 = vmatprep.subr.bf16.mxu0 0
    %795 = vmatpush1.bf16.xpose.msra.mxu0 0
    %796 = vmatprep.subr.bf16.mxu0 0
    %797 = vmatpush1.bf16.xpose.msra.mxu0 0
    %798 = vmatprep.subr.bf16.mxu0 0
    %799 = vmatpush1.bf16.xpose.msra.mxu0 0
    %800 = vmatprep.subr.bf16.mxu0 0
    %801 = vmatpush1.bf16.xpose.msra.mxu0 0
    %802 = vmatprep.subr.bf16.mxu0 0
    %803 = vmatpush1.bf16.xpose.msra.mxu0 0
    %804 = vmatprep.subr.bf16.mxu0 0
    %805 = vmatpush1.bf16.xpose.msra.mxu0 0
    %806 = vmatprep.subr.bf16.mxu0 0
    %807 = vmatpush1.bf16.xpose.msra.mxu0 0
    %808 = vmatprep.subr.bf16.mxu0 0
    %809 = vmatpush1.bf16.xpose.msra.mxu0 0
    %810 = vmatprep.subr.bf16.mxu0 0
    %811 = vmatpush1.bf16.xpose.msra.mxu0 0
    %812 = vmatprep.subr.bf16.mxu0 0
    %813 = vmatpush1.bf16.xpose.msra.mxu0 0
    %814 = vmatprep.subr.bf16.mxu0 0
    %815 = vmatpush1.bf16.xpose.msra.mxu0 0
    %816 = vmatprep.subr.bf16.mxu0 0
    %817 = vmatpush1.bf16.xpose.msra.mxu0 0
    %818 = vmatprep.mubr.bf16.mxu0 0
    %819 = vmatmul.mubr.bf16.gmra.mrb[0].mxu0 %v781
    %v820 = vpop.f32.mrb[0].mxu0
    %v821 = vadd.f32 0.0, %v820
    %v822 = vpop.f32.mrb[0].mxu0
    %v823 = vpop.f32.mrb[0].mxu0
    %v824 = vpop.f32.mrb[0].mxu0
    %825 = vdwg.mxu0
    %v826 = vpack.c.b16 %v774, %v774
    %827 = vrot.lane.b32.xlu0 %v826, 112
    %v828 = vpop.permute.xlu0 %827
    %829 = vrot.lane.b32.xlu0 %v826, 80
    %v830 = vpop.permute.xlu0 %829
    %v832 = vsel %vm315, %v828, 0
    %v835 = vsel %vm315, %v830, 0
    %837 = vmatprep.subr.bf16.mxu0 0
    %838 = vmatpush1.bf16.xpose.msra.mxu0 %v835
    %839 = vmatprep.subr.bf16.mxu0 0
    %840 = vmatpush1.bf16.xpose.msra.mxu0 0
    %841 = vmatprep.subr.bf16.mxu0 0
    %842 = vmatpush1.bf16.xpose.msra.mxu0 0
    %843 = vmatprep.subr.bf16.mxu0 0
    %844 = vmatpush1.bf16.xpose.msra.mxu0 0
    %845 = vmatprep.subr.bf16.mxu0 0
    %846 = vmatpush1.bf16.xpose.msra.mxu0 0
    %847 = vmatprep.subr.bf16.mxu0 0
    %848 = vmatpush1.bf16.xpose.msra.mxu0 0
    %849 = vmatprep.subr.bf16.mxu0 0
    %850 = vmatpush1.bf16.xpose.msra.mxu0 0
    %851 = vmatprep.subr.bf16.mxu0 0
    %852 = vmatpush1.bf16.xpose.msra.mxu0 0
    %853 = vmatprep.subr.bf16.mxu0 0
    %854 = vmatpush1.bf16.xpose.msra.mxu0 0
    %855 = vmatprep.subr.bf16.mxu0 0
    %856 = vmatpush1.bf16.xpose.msra.mxu0 0
    %857 = vmatprep.subr.bf16.mxu0 0
    %858 = vmatpush1.bf16.xpose.msra.mxu0 0
    %859 = vmatprep.subr.bf16.mxu0 0
    %860 = vmatpush1.bf16.xpose.msra.mxu0 0
    %861 = vmatprep.subr.bf16.mxu0 0
    %862 = vmatpush1.bf16.xpose.msra.mxu0 0
    %863 = vmatprep.subr.bf16.mxu0 0
    %864 = vmatpush1.bf16.xpose.msra.mxu0 0
    %865 = vmatprep.subr.bf16.mxu0 0
    %866 = vmatpush1.bf16.xpose.msra.mxu0 0
    %867 = vmatprep.subr.bf16.mxu0 0
    %868 = vmatpush1.bf16.xpose.msra.mxu0 0
    %869 = vmatprep.mubr.bf16.mxu0 0
    %870 = vmatmul.mubr.bf16.gmra.mrb[0].mxu0 %v832
    %v871 = vpop.f32.mrb[0].mxu0
    %v872 = vadd.f32 0.0, %v871
    %v873 = vpop.f32.mrb[0].mxu0
    %v874 = vpop.f32.mrb[0].mxu0
    %v875 = vpop.f32.mrb[0].mxu0
    %876 = vdwg.mxu0
    %v877 = vsel %vm315, %v821, -inf
    %878 = vmax.xlane.f32.xlu0 %v877
    %v879 = vpop.xlane.xlu0 %878
    %v880 = vsel %vm315, %v872, -inf
    %881 = vmax.xlane.f32.xlu0 %v880
    %v882 = vpop.xlane.xlu0 %881
    %v883 = vsub.f32 %v821, %v879
    %v884 = vsub.f32 %v872, %v882
    %v885 = vmul.f32 %v883, 1.442695
    %v886 = vpow.pop %v885
    %v887 = vmul.f32 %v884, 1.442695
    %v888 = vpow.pop %v887
    %v889 = vsel %vm315, %v886, 0.0
    %890 = vadd.xlane.f32.xlu0 %v889
    %v891 = vpop.xlane.xlu0 %890
    %v892 = vsel %vm315, %v888, 0.0
    %893 = vadd.xlane.f32.xlu0 %v892
    %v894 = vpop.xlane.xlu0 %893
    %v895 = vrcp.pop %v891
    %v896 = vrcp.pop %v894
    %v897 = vmul.f32 %v886, %v895
    %v898 = vmul.f32 %v888, %v896
    %s899 = scalar_lea.vmem [#allocation25], 16
    %900 = vst.msk [vmem:[%s899] sm:$0xff] %vm315, %v897
    %901 = vst.msk [vmem:[%s899 + $0x20] sm:$0xff] %vm315, %v898
    %v902 = vpack.c.bf16 %v897, %v897
    %v903 = vpack.c.bf16 %v898, %v898
    %904 = vrot.lane.b32.xlu0 %v775, 48
    %v905 = vpop.permute.xlu0 %904
    %v907 = vsel %vm315, %v902, 0
    %v910 = vsel %vm441, %v905, 0
    %912 = vmatprep.subr.bf16.mxu0 0
    %913 = vmatpush1.bf16.msra.mxu0 %v910
    %914 = vmatprep.subr.bf16.mxu0 0
    %915 = vmatpush1.bf16.msra.mxu0 0
    %916 = vmatprep.subr.bf16.mxu0 0
    %917 = vmatpush1.bf16.msra.mxu0 0
    %918 = vmatprep.subr.bf16.mxu0 0
    %919 = vmatpush1.bf16.msra.mxu0 0
    %920 = vmatprep.subr.bf16.mxu0 0
    %921 = vmatpush1.bf16.msra.mxu0 0
    %922 = vmatprep.subr.bf16.mxu0 0
    %923 = vmatpush1.bf16.msra.mxu0 0
    %924 = vmatprep.subr.bf16.mxu0 0
    %925 = vmatpush1.bf16.msra.mxu0 0
    %926 = vmatprep.subr.bf16.mxu0 0
    %927 = vmatpush1.bf16.msra.mxu0 0
    %928 = vmatprep.subr.bf16.mxu0 0
    %929 = vmatpush1.bf16.msra.mxu0 0
    %930 = vmatprep.subr.bf16.mxu0 0
    %931 = vmatpush1.bf16.msra.mxu0 0
    %932 = vmatprep.subr.bf16.mxu0 0
    %933 = vmatpush1.bf16.msra.mxu0 0
    %934 = vmatprep.subr.bf16.mxu0 0
    %935 = vmatpush1.bf16.msra.mxu0 0
    %936 = vmatprep.subr.bf16.mxu0 0
    %937 = vmatpush1.bf16.msra.mxu0 0
    %938 = vmatprep.subr.bf16.mxu0 0
    %939 = vmatpush1.bf16.msra.mxu0 0
    %940 = vmatprep.subr.bf16.mxu0 0
    %941 = vmatpush1.bf16.msra.mxu0 0
    %942 = vmatprep.subr.bf16.mxu0 0
    %943 = vmatpush1.bf16.msra.mxu0 0
    %944 = vmatprep.mubr.bf16.mxu0 0
    %945 = vmatmul.mubr.bf16.gmra.mrb[0].mxu0 %v907
    %v946 = vpop.f32.mrb[0].mxu0
    %v947 = vadd.f32 0.0, %v946
    %v948 = vpop.f32.mrb[0].mxu0
    %v949 = vpop.f32.mrb[0].mxu0
    %v950 = vpop.f32.mrb[0].mxu0
    %951 = vdwg.mxu0
    %952 = vrot.lane.b32.xlu0 %v826, 48
    %v953 = vpop.permute.xlu0 %952
    %v955 = vsel %vm315, %v903, 0
    %v958 = vsel %vm441, %v953, 0
    %960 = vmatprep.subr.bf16.mxu0 0
    %961 = vmatpush1.bf16.msra.mxu0 %v958
    %962 = vmatprep.subr.bf16.mxu0 0
    %963 = vmatpush1.bf16.msra.mxu0 0
    %964 = vmatprep.subr.bf16.mxu0 0
    %965 = vmatpush1.bf16.msra.mxu0 0
    %966 = vmatprep.subr.bf16.mxu0 0
    %967 = vmatpush1.bf16.msra.mxu0 0
    %968 = vmatprep.subr.bf16.mxu0 0
    %969 = vmatpush1.bf16.msra.mxu0 0
    %970 = vmatprep.subr.bf16.mxu0 0
    %971 = vmatpush1.bf16.msra.mxu0 0
    %972 = vmatprep.subr.bf16.mxu0 0
    %973 = vmatpush1.bf16.msra.mxu0 0
    %974 = vmatprep.subr.bf16.mxu0 0
    %975 = vmatpush1.bf16.msra.mxu0 0
    %976 = vmatprep.subr.bf16.mxu0 0
    %977 = vmatpush1.bf16.msra.mxu0 0
    %978 = vmatprep.subr.bf16.mxu0 0
    %979 = vmatpush1.bf16.msra.mxu0 0
    %980 = vmatprep.subr.bf16.mxu0 0
    %981 = vmatpush1.bf16.msra.mxu0 0
    %982 = vmatprep.subr.bf16.mxu0 0
    %983 = vmatpush1.bf16.msra.mxu0 0
    %984 = vmatprep.subr.bf16.mxu0 0
    %985 = vmatpush1.bf16.msra.mxu0 0
    %986 = vmatprep.subr.bf16.mxu0 0
    %987 = vmatpush1.bf16.msra.mxu0 0
    %988 = vmatprep.subr.bf16.mxu0 0
    %989 = vmatpush1.bf16.msra.mxu0 0
    %990 = vmatprep.subr.bf16.mxu0 0
    %991 = vmatpush1.bf16.msra.mxu0 0
    %992 = vmatprep.mubr.bf16.mxu0 0
    %993 = vmatmul.mubr.bf16.gmra.mrb[0].mxu0 %v955
    %v994 = vpop.f32.mrb[0].mxu0
    %v995 = vadd.f32 0.0, %v994
    %v996 = vpop.f32.mrb[0].mxu0
    %v997 = vpop.f32.mrb[0].mxu0
    %v998 = vpop.f32.mrb[0].mxu0
    %999 = vdwg.mxu0
    %v1000 = vpack.c.bf16 %v995, %v947
    %1002 = vrot.lane.b32.xlu0 %v1000, 16
    %v1003 = vpop.permute.xlu0 %1002
    %vm1005 = vcmask 195712
    %1006 = vst.msk [vmem:[#allocation3] sm:$0xff] %vm1005, %v1003
    %v1007 = vld [vmem:[#allocation2] sm:$0xff]
    %v1009 = vunpack.c.l.b16 %v1007
    %v1010 = vunpack.c.h.b16 %v1007
    %v1011 = vpack.c.b16 %v1009, %v1009
    %1012 = vrot.lane.b32.xlu0 %v1011, 104
    %v1013 = vpop.permute.xlu0 %1012
    %1014 = vrot.lane.b32.xlu0 %v1011, 72
    %v1015 = vpop.permute.xlu0 %1014
    %v1017 = vsel %vm315, %v1013, 0
    %v1020 = vsel %vm315, %v1015, 0
    %1022 = vmatprep.subr.bf16.mxu0 0
    %1023 = vmatpush1.bf16.xpose.msra.mxu0 %v1020
    %1024 = vmatprep.subr.bf16.mxu0 0
    %1025 = vmatpush1.bf16.xpose.msra.mxu0 0
    %1026 = vmatprep.subr.bf16.mxu0 0
    %1027 = vmatpush1.bf16.xpose.msra.mxu0 0
    %1028 = vmatprep.subr.bf16.mxu0 0
    %1029 = vmatpush1.bf16.xpose.msra.mxu0 0
    %1030 = vmatprep.subr.bf16.mxu0 0
    %1031 = vmatpush1.bf16.xpose.msra.mxu0 0
    %1032 = vmatprep.subr.bf16.mxu0 0
    %1033 = vmatpush1.bf16.xpose.msra.mxu0 0
    %1034 = vmatprep.subr.bf16.mxu0 0
    %1035 = vmatpush1.bf16.xpose.msra.mxu0 0
    %1036 = vmatprep.subr.bf16.mxu0 0
    %1037 = vmatpush1.bf16.xpose.msra.mxu0 0
    %1038 = vmatprep.subr.bf16.mxu0 0
    %1039 = vmatpush1.bf16.xpose.msra.mxu0 0
    %1040 = vmatprep.subr.bf16.mxu0 0
    %1041 = vmatpush1.bf16.xpose.msra.mxu0 0
    %1042 = vmatprep.subr.bf16.mxu0 0
    %1043 = vmatpush1.bf16.xpose.msra.mxu0 0
    %1044 = vmatprep.subr.bf16.mxu0 0
    %1045 = vmatpush1.bf16.xpose.msra.mxu0 0
    %1046 = vmatprep.subr.bf16.mxu0 0
    %1047 = vmatpush1.bf16.xpose.msra.mxu0 0
    %1048 = vmatprep.subr.bf16.mxu0 0
    %1049 = vmatpush1.bf16.xpose.msra.mxu0 0
    %1050 = vmatprep.subr.bf16.mxu0 0
    %1051 = vmatpush1.bf16.xpose.msra.mxu0 0
    %1052 = vmatprep.subr.bf16.mxu0 0
    %1053 = vmatpush1.bf16.xpose.msra.mxu0 0
    %1054 = vmatprep.mubr.bf16.mxu0 0
    %1055 = vmatmul.mubr.bf16.gmra.mrb[0].mxu0 %v1017
    %v1056 = vpop.f32.mrb[0].mxu0
    %v1057 = vadd.f32 0.0, %v1056
    %v1058 = vpop.f32.mrb[0].mxu0
    %v1059 = vpop.f32.mrb[0].mxu0
    %v1060 = vpop.f32.mrb[0].mxu0
    %1061 = vdwg.mxu0
    %v1062 = vpack.c.b16 %v1010, %v1010
    %1063 = vrot.lane.b32.xlu0 %v1062, 104
    %v1064 = vpop.permute.xlu0 %1063
    %1065 = vrot.lane.b32.xlu0 %v1062, 72
    %v1066 = vpop.permute.xlu0 %1065
    %v1068 = vsel %vm315, %v1064, 0
    %v1071 = vsel %vm315, %v1066, 0
    %1073 = vmatprep.subr.bf16.mxu0 0
    %1074 = vmatpush1.bf16.xpose.msra.mxu0 %v1071
    %1075 = vmatprep.subr.bf16.mxu0 0
    %1076 = vmatpush1.bf16.xpose.msra.mxu0 0
    %1077 = vmatprep.subr.bf16.mxu0 0
    %1078 = vmatpush1.bf16.xpose.msra.mxu0 0
    %1079 = vmatprep.subr.bf16.mxu0 0
    %1080 = vmatpush1.bf16.xpose.msra.mxu0 0
    %1081 = vmatprep.subr.bf16.mxu0 0
    %1082 = vmatpush1.bf16.xpose.msra.mxu0 0
    %1083 = vmatprep.subr.bf16.mxu0 0
    %1084 = vmatpush1.bf16.xpose.msra.mxu0 0
    %1085 = vmatprep.subr.bf16.mxu0 0
    %1086 = vmatpush1.bf16.xpose.msra.mxu0 0
    %1087 = vmatprep.subr.bf16.mxu0 0
    %1088 = vmatpush1.bf16.xpose.msra.mxu0 0
    %1089 = vmatprep.subr.bf16.mxu0 0
    %1090 = vmatpush1.bf16.xpose.msra.mxu0 0
    %1091 = vmatprep.subr.bf16.mxu0 0
    %1092 = vmatpush1.bf16.xpose.msra.mxu0 0
    %1093 = vmatprep.subr.bf16.mxu0 0
    %1094 = vmatpush1.bf16.xpose.msra.mxu0 0
    %1095 = vmatprep.subr.bf16.mxu0 0
    %1096 = vmatpush1.bf16.xpose.msra.mxu0 0
    %1097 = vmatprep.subr.bf16.mxu0 0
    %1098 = vmatpush1.bf16.xpose.msra.mxu0 0
    %1099 = vmatprep.subr.bf16.mxu0 0
    %1100 = vmatpush1.bf16.xpose.msra.mxu0 0
    %1101 = vmatprep.subr.bf16.mxu0 0
    %1102 = vmatpush1.bf16.xpose.msra.mxu0 0
    %1103 = vmatprep.subr.bf16.mxu0 0
    %1104 = vmatpush1.bf16.xpose.msra.mxu0 0
    %1105 = vmatprep.mubr.bf16.mxu0 0
    %1106 = vmatmul.mubr.bf16.gmra.mrb[0].mxu0 %v1068
    %v1107 = vpop.f32.mrb[0].mxu0
    %v1108 = vadd.f32 0.0, %v1107
    %v1109 = vpop.f32.mrb[0].mxu0
    %v1110 = vpop.f32.mrb[0].mxu0
    %v1111 = vpop.f32.mrb[0].mxu0
    %1112 = vdwg.mxu0
    %v1113 = vsel %vm315, %v1057, -inf
    %1114 = vmax.xlane.f32.xlu0 %v1113
    %v1115 = vpop.xlane.xlu0 %1114
    %v1116 = vsel %vm315, %v1108, -inf
    %1117 = vmax.xlane.f32.xlu0 %v1116
    %v1118 = vpop.xlane.xlu0 %1117
    %v1119 = vsub.f32 %v1057, %v1115
    %v1120 = vsub.f32 %v1108, %v1118
    %v1121 = vmul.f32 %v1119, 1.442695
    %v1122 = vpow.pop %v1121
    %v1123 = vmul.f32 %v1120, 1.442695
    %v1124 = vpow.pop %v1123
    %v1125 = vsel %vm315, %v1122, 0.0
    %1126 = vadd.xlane.f32.xlu0 %v1125
    %v1127 = vpop.xlane.xlu0 %1126
    %v1128 = vsel %vm315, %v1124, 0.0
    %1129 = vadd.xlane.f32.xlu0 %v1128
    %v1130 = vpop.xlane.xlu0 %1129
    %v1131 = vrcp.pop %v1127
    %v1132 = vrcp.pop %v1130
    %v1133 = vmul.f32 %v1122, %v1131
    %v1134 = vmul.f32 %v1124, %v1132
    %s1135 = scalar_lea.vmem [#allocation25], 24
    %1136 = vst.msk [vmem:[%s1135] sm:$0xff] %vm315, %v1133
    %1137 = vst.msk [vmem:[%s1135 + $0x20] sm:$0xff] %vm315, %v1134
    %v1138 = vpack.c.bf16 %v1133, %v1133
    %v1139 = vpack.c.bf16 %v1134, %v1134
    %1140 = vrot.lane.b32.xlu0 %v1011, 40
    %v1141 = vpop.permute.xlu0 %1140
    %v1143 = vsel %vm315, %v1138, 0
    %v1146 = vsel %vm441, %v1141, 0
    %1148 = vmatprep.subr.bf16.mxu0 0
    %1149 = vmatpush1.bf16.msra.mxu0 %v1146
    %1150 = vmatprep.subr.bf16.mxu0 0
    %1151 = vmatpush1.bf16.msra.mxu0 0
    %1152 = vmatprep.subr.bf16.mxu0 0
    %1153 = vmatpush1.bf16.msra.mxu0 0
    %1154 = vmatprep.subr.bf16.mxu0 0
    %1155 = vmatpush1.bf16.msra.mxu0 0
    %1156 = vmatprep.subr.bf16.mxu0 0
    %1157 = vmatpush1.bf16.msra.mxu0 0
    %1158 = vmatprep.subr.bf16.mxu0 0
    %1159 = vmatpush1.bf16.msra.mxu0 0
    %1160 = vmatprep.subr.bf16.mxu0 0
    %1161 = vmatpush1.bf16.msra.mxu0 0
    %1162 = vmatprep.subr.bf16.mxu0 0
    %1163 = vmatpush1.bf16.msra.mxu0 0
    %1164 = vmatprep.subr.bf16.mxu0 0
    %1165 = vmatpush1.bf16.msra.mxu0 0
    %1166 = vmatprep.subr.bf16.mxu0 0
    %1167 = vmatpush1.bf16.msra.mxu0 0
    %1168 = vmatprep.subr.bf16.mxu0 0
    %1169 = vmatpush1.bf16.msra.mxu0 0
    %1170 = vmatprep.subr.bf16.mxu0 0
    %1171 = vmatpush1.bf16.msra.mxu0 0
    %1172 = vmatprep.subr.bf16.mxu0 0
    %1173 = vmatpush1.bf16.msra.mxu0 0
    %1174 = vmatprep.subr.bf16.mxu0 0
    %1175 = vmatpush1.bf16.msra.mxu0 0
    %1176 = vmatprep.subr.bf16.mxu0 0
    %1177 = vmatpush1.bf16.msra.mxu0 0
    %1178 = vmatprep.subr.bf16.mxu0 0
    %1179 = vmatpush1.bf16.msra.mxu0 0
    %1180 = vmatprep.mubr.bf16.mxu0 0
    %1181 = vmatmul.mubr.bf16.gmra.mrb[0].mxu0 %v1143
    %v1182 = vpop.f32.mrb[0].mxu0
    %v1183 = vadd.f32 0.0, %v1182
    %v1184 = vpop.f32.mrb[0].mxu0
    %v1185 = vpop.f32.mrb[0].mxu0
    %v1186 = vpop.f32.mrb[0].mxu0
    %1187 = vdwg.mxu0
    %1188 = vrot.lane.b32.xlu0 %v1062, 40
    %v1189 = vpop.permute.xlu0 %1188
    %v1191 = vsel %vm315, %v1139, 0
    %v1194 = vsel %vm441, %v1189, 0
    %1196 = vmatprep.subr.bf16.mxu0 0
    %1197 = vmatpush1.bf16.msra.mxu0 %v1194
    %1198 = vmatprep.subr.bf16.mxu0 0
    %1199 = vmatpush1.bf16.msra.mxu0 0
    %1200 = vmatprep.subr.bf16.mxu0 0
    %1201 = vmatpush1.bf16.msra.mxu0 0
    %1202 = vmatprep.subr.bf16.mxu0 0
    %1203 = vmatpush1.bf16.msra.mxu0 0
    %1204 = vmatprep.subr.bf16.mxu0 0
    %1205 = vmatpush1.bf16.msra.mxu0 0
    %1206 = vmatprep.subr.bf16.mxu0 0
    %1207 = vmatpush1.bf16.msra.mxu0 0
    %1208 = vmatprep.subr.bf16.mxu0 0
    %1209 = vmatpush1.bf16.msra.mxu0 0
    %1210 = vmatprep.subr.bf16.mxu0 0
    %1211 = vmatpush1.bf16.msra.mxu0 0
    %1212 = vmatprep.subr.bf16.mxu0 0
    %1213 = vmatpush1.bf16.msra.mxu0 0
    %1214 = vmatprep.subr.bf16.mxu0 0
    %1215 = vmatpush1.bf16.msra.mxu0 0
    %1216 = vmatprep.subr.bf16.mxu0 0
    %1217 = vmatpush1.bf16.msra.mxu0 0
    %1218 = vmatprep.subr.bf16.mxu0 0
    %1219 = vmatpush1.bf16.msra.mxu0 0
    %1220 = vmatprep.subr.bf16.mxu0 0
    %1221 = vmatpush1.bf16.msra.mxu0 0
    %1222 = vmatprep.subr.bf16.mxu0 0
    %1223 = vmatpush1.bf16.msra.mxu0 0
    %1224 = vmatprep.subr.bf16.mxu0 0
    %1225 = vmatpush1.bf16.msra.mxu0 0
    %1226 = vmatprep.subr.bf16.mxu0 0
    %1227 = vmatpush1.bf16.msra.mxu0 0
    %1228 = vmatprep.mubr.bf16.mxu0 0
    %1229 = vmatmul.mubr.bf16.gmra.mrb[0].mxu0 %v1191
    %v1230 = vpop.f32.mrb[0].mxu0
    %v1231 = vadd.f32 0.0, %v1230
    %v1232 = vpop.f32.mrb[0].mxu0
    %v1233 = vpop.f32.mrb[0].mxu0
    %v1234 = vpop.f32.mrb[0].mxu0
    %1235 = vdwg.mxu0
    %v1236 = vpack.c.bf16 %v1231, %v1183
    %1238 = vrot.lane.b32.xlu0 %v1236, 24
    %v1239 = vpop.permute.xlu0 %1238
    %vm1241 = vcmask 261312
    %1242 = vst.msk [vmem:[#allocation3] sm:$0xff] %vm1241, %v1239
    %v1243 = vld [vmem:[#allocation3] sm:$0xff]
    %v1244 = vld [vmem:[#allocation9] sm:$0xf]
    %v1245 = vld [vmem:[#allocation9 + $0x4] sm:$0xf]
    %v1246 = vld [vmem:[#allocation9 + $0x8] sm:$0xf]
    %v1247 = vld [vmem:[#allocation9 + $0xc] sm:$0xf]
    %v1248 = vld [vmem:[#allocation10] sm:$0x1]
    %v1250 = vlaneseq
    %v1251 = vshrl.u32 %v1250, 7
    %v1252 = vsub.s32 0, %v1251
    %v1253 = vrot.slane %v1248, %v1252
    %v1259 = vunpack.c.l.b16 %v1244
    %v1260 = vunpack.c.l.b16 %v1245
    %v1261 = vunpack.c.l.b16 %v1246
    %v1262 = vunpack.c.l.b16 %v1247
    %v1263 = vpack.c.b16 %v1260, %v1259
    %v1264 = vpack.c.b16 %v1262, %v1261
    %v1268 = vsel %vm199, %v1243, 0
    %1270 = vmatprep.subr.bf16.mxu0 0
    %1271 = vmatpush1.bf16.msra.mxu0 %v1263
    %1272 = vmatprep.subr.bf16.mxu0 0
    %1273 = vmatpush1.bf16.msra.mxu0 %v1264
    %1274 = vmatprep.subr.bf16.mxu0 0
    %1275 = vmatpush1.bf16.msra.mxu0 0
    %1276 = vmatprep.subr.bf16.mxu0 0
    %1277 = vmatpush1.bf16.msra.mxu0 0
    %1278 = vmatprep.subr.bf16.mxu0 0
    %1279 = vmatpush1.bf16.msra.mxu0 0
    %1280 = vmatprep.subr.bf16.mxu0 0
    %1281 = vmatpush1.bf16.msra.mxu0 0
    %1282 = vmatprep.subr.bf16.mxu0 0
    %1283 = vmatpush1.bf16.msra.mxu0 0
    %1284 = vmatprep.subr.bf16.mxu0 0
    %1285 = vmatpush1.bf16.msra.mxu0 0
    %1286 = vmatprep.subr.bf16.mxu0 0
    %1287 = vmatpush1.bf16.msra.mxu0 0
    %1288 = vmatprep.subr.bf16.mxu0 0
    %1289 = vmatpush1.bf16.msra.mxu0 0
    %1290 = vmatprep.subr.bf16.mxu0 0
    %1291 = vmatpush1.bf16.msra.mxu0 0
    %1292 = vmatprep.subr.bf16.mxu0 0
    %1293 = vmatpush1.bf16.msra.mxu0 0
    %1294 = vmatprep.subr.bf16.mxu0 0
    %1295 = vmatpush1.bf16.msra.mxu0 0
    %1296 = vmatprep.subr.bf16.mxu0 0
    %1297 = vmatpush1.bf16.msra.mxu0 0
    %1298 = vmatprep.subr.bf16.mxu0 0
    %1299 = vmatpush1.bf16.msra.mxu0 0
    %1300 = vmatprep.subr.bf16.mxu0 0
    %1301 = vmatpush1.bf16.msra.mxu0 0
    %1302 = vmatprep.mubr.bf16.mxu0 0
    %1303 = vmatmul.mubr.bf16.gmra.mrb[0].mxu0 %v1268
    %v1304 = vpop.f32.mrb[0].mxu0
    %v1305 = vadd.f32 %v1253, %v1304
    %v1306 = vpop.f32.mrb[0].mxu0
    %v1307 = vpop.f32.mrb[0].mxu0
    %v1308 = vadd.f32 %v1253, %v1307
    %v1309 = vpop.f32.mrb[0].mxu0
    %1310 = vdwg.mxu0
    %v1311 = vadd.f32 %v195, %v1305
    %v1312 = vadd.f32 %v196, %v1308
    %v1313 = vld [vmem:[#allocation15] sm:$0x1]
    %v1314 = vld [vmem:[#allocation16] sm:$0x1]
    %v1315 = vsel %vm199, %v1311, 0.0
    %1316 = vadd.xlane.f32.xlu0 %v1315
    %v1317 = vpop.xlane.xlu0 %1316
    %v1318 = vsel %vm199, %v1312, 0.0
    %1319 = vadd.xlane.f32.xlu0 %v1318
    %v1320 = vpop.xlane.xlu0 %1319
    %v1321 = vmul.f32 %v1317, %v206
    %v1322 = vmul.f32 %v1320, %v206
    %v1323 = vsub.f32 %v1311, %v1321
    %v1324 = vsub.f32 %v1312, %v1322
    %v1325 = vmul.f32 %v1323, %v1323
    %v1326 = vmul.f32 %v1324, %v1324
    %v1327 = vsel %vm199, %v1325, 0.0
    %1328 = vadd.xlane.f32.xlu0 %v1327
    %v1329 = vpop.xlane.xlu0 %1328
    %v1330 = vsel %vm199, %v1326, 0.0
    %1331 = vadd.xlane.f32.xlu0 %v1330
    %v1332 = vpop.xlane.xlu0 %1331
    %v1333 = vmul.f32 %v1329, %v206
    %v1334 = vmul.f32 %v1332, %v206
    %v1335 = vadd.f32 %v1333, 1e-05
    %v1336 = vadd.f32 %v1334, 1e-05
    %v1337 = vrsqrt.pop %v1335
    %v1338 = vrsqrt.pop %v1336
    %v1339 = vmul.f32 %v1323, %v1337
    %v1340 = vmul.f32 %v1324, %v1338
    %v1342 = vlaneseq
    %v1343 = vshrl.u32 %v1342, 7
    %v1344 = vsub.s32 0, %v1343
    %v1345 = vrot.slane %v1313, %v1344
    %v1347 = vmul.f32 %v1339, %v1345
    %v1348 = vmul.f32 %v1340, %v1345
    %v1350 = vlaneseq
    %v1351 = vshrl.u32 %v1350, 7
    %v1352 = vsub.s32 0, %v1351
    %v1353 = vrot.slane %v1314, %v1352
    %v1355 = vadd.f32 %v1347, %v1353
    %v1356 = vadd.f32 %v1348, %v1353
    %v1357 = vpack.c.bf16 %v1356, %v1355
    %v1358 = vld [vmem:[#allocation18] sm:$0xf]
    %v1359 = vld [vmem:[#allocation18 + $0x4] sm:$0xf]
    %v1360 = vld [vmem:[#allocation18 + $0x8] sm:$0xf]
    %v1361 = vld [vmem:[#allocation18 + $0xc] sm:$0xf]
    %v1362 = vld [vmem:[#allocation19] sm:$0x1]
    %v1364 = vlaneseq
    %v1365 = vshrl.u32 %v1364, 7
    %v1366 = vsub.s32 0, %v1365
    %v1367 = vrot.slane %v1362, %v1366
    %v1373 = vunpack.c.l.b16 %v1358
    %v1374 = vunpack.c.l.b16 %v1359
    %v1375 = vunpack.c.l.b16 %v1360
    %v1376 = vunpack.c.l.b16 %v1361
    %v1377 = vpack.c.b16 %v1374, %v1373
    %v1378 = vpack.c.b16 %v1376, %v1375
    %v1382 = vsel %vm199, %v1357, 0
    %1384 = vmatprep.subr.bf16.mxu0 0
    %1385 = vmatpush1.bf16.msra.mxu0 %v1377
    %1386 = vmatprep.subr.bf16.mxu0 0
    %1387 = vmatpush1.bf16.msra.mxu0 %v1378
    %1388 = vmatprep.subr.bf16.mxu0 0
    %1389 = vmatpush1.bf16.msra.mxu0 0
    %1390 = vmatprep.subr.bf16.mxu0 0
    %1391 = vmatpush1.bf16.msra.mxu0 0
    %1392 = vmatprep.subr.bf16.mxu0 0
    %1393 = vmatpush1.bf16.msra.mxu0 0
    %1394 = vmatprep.subr.bf16.mxu0 0
    %1395 = vmatpush1.bf16.msra.mxu0 0
    %1396 = vmatprep.subr.bf16.mxu0 0
    %1397 = vmatpush1.bf16.msra.mxu0 0
    %1398 = vmatprep.subr.bf16.mxu0 0
    %1399 = vmatpush1.bf16.msra.mxu0 0
    %1400 = vmatprep.subr.bf16.mxu0 0
    %1401 = vmatpush1.bf16.msra.mxu0 0
    %1402 = vmatprep.subr.bf16.mxu0 0
    %1403 = vmatpush1.bf16.msra.mxu0 0
    %1404 = vmatprep.subr.bf16.mxu0 0
    %1405 = vmatpush1.bf16.msra.mxu0 0
    %1406 = vmatprep.subr.bf16.mxu0 0
    %1407 = vmatpush1.bf16.msra.mxu0 0
    %1408 = vmatprep.subr.bf16.mxu0 0
    %1409 = vmatpush1.bf16.msra.mxu0 0
    %1410 = vmatprep.subr.bf16.mxu0 0
    %1411 = vmatpush1.bf16.msra.mxu0 0
    %1412 = vmatprep.subr.bf16.mxu0 0
    %1413 = vmatpush1.bf16.msra.mxu0 0
    %1414 = vmatprep.subr.bf16.mxu0 0
    %1415 = vmatpush1.bf16.msra.mxu0 0
    %1416 = vmatprep.mubr.bf16.mxu0 0
    %1417 = vmatmul.mubr.bf16.gmra.mrb[0].mxu0 %v1382
    %v1418 = vpop.f32.mrb[0].mxu0
    %v1419 = vadd.f32 %v1367, %v1418
    %v1420 = vpop.f32.mrb[0].mxu0
    %v1421 = vpop.f32.mrb[0].mxu0
    %v1422 = vadd.f32 %v1367, %v1421
    %v1423 = vpop.f32.mrb[0].mxu0
    %1424 = vdwg.mxu0
    %v1425 = vmul.f32 %v1419, 0.5
    %v1426 = vmul.f32 %v1422, 0.5
    %v1427 = vmul.f32 %v1419, 0.70710677
    %v1428 = vmul.f32 %v1422, 0.70710677
    %v1429 = verf.f32.pop %v1427
    %v1430 = verf.f32.pop %v1428
    %v1431 = vadd.f32 %v1429, 1.0
    %v1432 = vadd.f32 %v1430, 1.0
    %v1433 = vmul.f32 %v1425, %v1431
    %v1434 = vmul.f32 %v1426, %v1432
    %v1435 = vpack.c.bf16 %v1434, %v1433
    %v1436 = vld [vmem:[#allocation21] sm:$0xf]
    %v1437 = vld [vmem:[#allocation21 + $0x4] sm:$0xf]
    %v1438 = vld [vmem:[#allocation21 + $0x8] sm:$0xf]
    %v1439 = vld [vmem:[#allocation21 + $0xc] sm:$0xf]
    %v1440 = vld [vmem:[#allocation21 + $0x10] sm:$0xf]
    %v1441 = vld [vmem:[#allocation21 + $0x14] sm:$0xf]
    %v1442 = vld [vmem:[#allocation21 + $0x18] sm:$0xf]
    %v1443 = vld [vmem:[#allocation21 + $0x1c] sm:$0xf]
    %v1444 = vld [vmem:[#allocation21 + $0x20] sm:$0xf]
    %v1445 = vld [vmem:[#allocation21 + $0x24] sm:$0xf]
    %v1446 = vld [vmem:[#allocation21 + $0x28] sm:$0xf]
    %v1447 = vld [vmem:[#allocation21 + $0x2c] sm:$0xf]
    %v1448 = vld [vmem:[#allocation21 + $0x30] sm:$0xf]
    %v1449 = vld [vmem:[#allocation21 + $0x34] sm:$0xf]
    %v1450 = vld [vmem:[#allocation21 + $0x38] sm:$0xf]
    %v1451 = vld [vmem:[#allocation21 + $0x3c] sm:$0xf]
    %v1452 = vld [vmem:[#allocation22] sm:$0x1]
    %v1454 = vlaneseq
    %v1455 = vshrl.u32 %v1454, 7
    %v1456 = vsub.s32 0, %v1455
    %v1457 = vrot.slane %v1452, %v1456
    %v1475 = vunpack.c.l.b16 %v1436
    %v1476 = vunpack.c.l.b16 %v1437
    %v1477 = vunpack.c.l.b16 %v1438
    %v1478 = vunpack.c.l.b16 %v1439
    %v1479 = vunpack.c.l.b16 %v1440
    %v1480 = vunpack.c.l.b16 %v1441
    %v1481 = vunpack.c.l.b16 %v1442
    %v1482 = vunpack.c.l.b16 %v1443
    %v1483 = vunpack.c.l.b16 %v1444
    %v1484 = vunpack.c.l.b16 %v1445
    %v1485 = vunpack.c.l.b16 %v1446
    %v1486 = vunpack.c.l.b16 %v1447
    %v1487 = vunpack.c.l.b16 %v1448
    %v1488 = vunpack.c.l.b16 %v1449
    %v1489 = vunpack.c.l.b16 %v1450
    %v1490 = vunpack.c.l.b16 %v1451
    %v1491 = vpack.c.b16 %v1476, %v1475
    %v1492 = vpack.c.b16 %v1478, %v1477
    %v1493 = vpack.c.b16 %v1480, %v1479
    %v1494 = vpack.c.b16 %v1482, %v1481
    %v1495 = vpack.c.b16 %v1484, %v1483
    %v1496 = vpack.c.b16 %v1486, %v1485
    %v1497 = vpack.c.b16 %v1488, %v1487
    %v1498 = vpack.c.b16 %v1490, %v1489
    %1507 = vmatprep.subr.bf16.mxu0 0
    %1508 = vmatpush1.bf16.msra.mxu0 %v1491
    %1509 = vmatprep.subr.bf16.mxu0 0
    %1510 = vmatpush1.bf16.msra.mxu0 %v1492
    %1511 = vmatprep.subr.bf16.mxu0 0
    %1512 = vmatpush1.bf16.msra.mxu0 %v1493
    %1513 = vmatprep.subr.bf16.mxu0 0
    %1514 = vmatpush1.bf16.msra.mxu0 %v1494
    %1515 = vmatprep.subr.bf16.mxu0 0
    %1516 = vmatpush1.bf16.msra.mxu0 %v1495
    %1517 = vmatprep.subr.bf16.mxu0 0
    %1518 = vmatpush1.bf16.msra.mxu0 %v1496
    %1519 = vmatprep.subr.bf16.mxu0 0
    %1520 = vmatpush1.bf16.msra.mxu0 %v1497
    %1521 = vmatprep.subr.bf16.mxu0 0
    %1522 = vmatpush1.bf16.msra.mxu0 %v1498
    %1523 = vmatprep.subr.bf16.mxu0 0
    %1524 = vmatpush1.bf16.msra.mxu0 0
    %1525 = vmatprep.subr.bf16.mxu0 0
    %1526 = vmatpush1.bf16.msra.mxu0 0
    %1527 = vmatprep.subr.bf16.mxu0 0
    %1528 = vmatpush1.bf16.msra.mxu0 0
    %1529 = vmatprep.subr.bf16.mxu0 0
    %1530 = vmatpush1.bf16.msra.mxu0 0
    %1531 = vmatprep.subr.bf16.mxu0 0
    %1532 = vmatpush1.bf16.msra.mxu0 0
    %1533 = vmatprep.subr.bf16.mxu0 0
    %1534 = vmatpush1.bf16.msra.mxu0 0
    %1535 = vmatprep.subr.bf16.mxu0 0
    %1536 = vmatpush1.bf16.msra.mxu0 0
    %1537 = vmatprep.subr.bf16.mxu0 0
    %1538 = vmatpush1.bf16.msra.mxu0 0
    %1539 = vmatprep.mubr.bf16.mxu0 0
    %1540 = vmatmul.mubr.bf16.gmra.mrb[0].mxu0 %v1435
    %v1541 = vpop.f32.mrb[0].mxu0
    %v1542 = vadd.f32 %v1457, %v1541
    %v1543 = vpop.f32.mrb[0].mxu0
    %v1544 = vpop.f32.mrb[0].mxu0
    %v1545 = vadd.f32 %v1457, %v1544
    %v1546 = vpop.f32.mrb[0].mxu0
    %1547 = vdwg.mxu0
    %v1548 = vadd.f32 %v1311, %v1542
    %v1549 = vadd.f32 %v1312, %v1545
    %1550 = vst.msk [vmem:[#allocation24] sm:$0xff] %vm199, %v1548
    %1551 = vst.msk [vmem:[#allocation24 + $0x8] sm:$0xff] %vm199, %v1549
    // Predicated region
    $region98: #{tpu_custom_call.1} parent=1 // pred_check
      _
    $region99: #{tpu_custom_call.1} parent=1 // pred_check_branch
      %1553 = sbr.rel (0) target = $region101
    $region100: #{tpu_custom_call.1} parent=1 // pred_region
      %s1555 = ssub.s32 256, 256
      %1556 = vsyncadd [#allocation6], %s1555
      %s1557 = sshll.u32 [#allocation24], 4
      %s1558 = int_to_ptr.vmem [resolvable:$true] %s1557
      %1563 = dma.vmem_to_hbm [thread:$0]  %s1558, 256, %s12, [#allocation6], 128, 128, 8
    $region101: #{tpu_custom_call.1} parent=1 // pred_fallthru
      _
    // Predicated region
    $region102: #{tpu_custom_call.1} parent=1 // pred_check
      _
    $region103: #{tpu_custom_call.1} parent=1 // pred_check_branch
      %1565 = sbr.rel (0) target = $region105
    $region104: #{tpu_custom_call.1} parent=1 // pred_region
      %s1567 = ssub.s32 1024, 1024
      %1568 = vsyncadd [#allocation26], %s1567
      %s1569 = sshll.u32 [#allocation25], 4
      %s1570 = int_to_ptr.vmem [resolvable:$true] %s1569
      %1575 = dma.vmem_to_hbm [thread:$0]  %s1570, 1024, %s13, [#allocation26], 128, 128, 8
    $region105: #{tpu_custom_call.1} parent=1 // pred_fallthru
      _
    // Predicated region
    $region106: #{tpu_custom_call.1} parent=1 // pred_check
      _
    $region107: #{tpu_custom_call.1} parent=1 // pred_check_branch
      %1577 = sbr.rel (0) target = $region109
    $region108: #{tpu_custom_call.1} parent=1 // pred_region
      %1578 = dma.done [#allocation6], 256
    $region109: #{tpu_custom_call.1} parent=1 // pred_fallthru
      _
    // Predicated region
    $region110: #{tpu_custom_call.1} parent=1 // pred_check
      _
    $region111: #{tpu_custom_call.1} parent=1 // pred_check_branch
      %1580 = sbr.rel (0) target = $region113
    $region112: #{tpu_custom_call.1} parent=1 // pred_region
      %1581 = dma.done [#allocation26], 1024
    $region113: #{tpu_custom_call.1} parent=1 // pred_fallthru
      _
    %1582 = vsyncpa [#allocation5], 1
    %1583 = vsyncpa [#allocation8], 1
    %1584 = vsyncpa [#allocation11], 1
    %1585 = vsyncpa [#allocation14], 1
    %1586 = vsyncpa [#allocation17], 1
    %1587 = vsyncpa [#allocation20], 1
    %1588 = vsyncpa [#allocation23], 1
    %1589 = vsyncpa [#allocation6], 1
    %1590 = vsyncpa [#allocation26], 1

</llo_original>
